<compile_context>
chip_gen: v5e
topology: v5e:2x2
jax: 0.10.0
libtpu: 0.0.40
codegen_flags: <defaults>
</compile_context>

<pallas_src>
import functools
import math

import jax
import jax.numpy as jnp
from jax.experimental import pallas as pl
from jax.experimental.pallas import tpu as pltpu


_VMEM_LIMIT = 48 * 1024 * 1024  # explicit cap: safe on v7x (64 MiB physical)


# ---------------------------- tiling helpers ----------------------------

def _tile(dim, target, align):
    """Largest align-multiple tile <= target that divides dim, else full dim."""
    if dim <= target:
        return dim
    t = (min(dim, target) // align) * align
    while t >= align:
        if dim % t == 0:
            return t
        t -= align
    return dim


def _tile_lane(dim, target):
    """Lane-dim tile: prefer 256-multiples (full MXU passes on v6e/v7x)."""
    if dim <= target:
        return dim
    if dim % 256 == 0:
        return _tile(dim, target, 256)
    return _tile(dim, target, 128)


# ---------------------------- dense (tiled matmul) ----------------------------

def _dense_kernel(x_ref, w_ref, b_ref, o_ref, acc_ref, *, activation):
    @pl.when(pl.program_id(2) == 0)
    def _():
        acc_ref[...] = jnp.zeros_like(acc_ref)

    acc_ref[...] += jnp.dot(x_ref[...].astype(jnp.bfloat16), w_ref[...],
                            preferred_element_type=jnp.float32)

    @pl.when(pl.program_id(2) == pl.num_programs(2) - 1)
    def _():
        y = acc_ref[...] + b_ref[...]          # bias (1, tn) broadcasts over rows
        if activation == "gelu":
            y = jax.nn.gelu(y, approximate=True)
        o_ref[...] = y.astype(o_ref.dtype)


def dense(x2d, w_bf16, b, activation=None, *, tm_t=1024, tn_t=512, tk_t=512):
    """y = act(x @ w + b); x bf16 [M,K], w bf16 [K,N], b f32 [N] -> bf16 [M,N]."""
    M, K = x2d.shape
    _, N = w_bf16.shape
    tm = _tile(M, tm_t, 8)
    tn = _tile_lane(N, tn_t)
    tk = _tile_lane(K, tk_t)
    return pl.pallas_call(
        functools.partial(_dense_kernel, activation=activation),
        out_shape=jax.ShapeDtypeStruct((M, N), jnp.bfloat16),
        grid=(M // tm, N // tn, K // tk),
        in_specs=[pl.BlockSpec((tm, tk), lambda i, j, k: (i, k)),
                  pl.BlockSpec((tk, tn), lambda i, j, k: (k, j)),
                  pl.BlockSpec((1, tn), lambda i, j, k: (0, j))],
        out_specs=pl.BlockSpec((tm, tn), lambda i, j, k: (i, j)),
        scratch_shapes=[pltpu.VMEM((tm, tn), jnp.float32)],
        compiler_params=pltpu.CompilerParams(
            dimension_semantics=("parallel", "parallel", "arbitrary"),
            vmem_limit_bytes=_VMEM_LIMIT),
    )(x2d, w_bf16, b.reshape(1, N))


# ------------------- dense + residual add + LayerNorm (fused) -------------------

def _dense_add_ln_kernel(x_ref, w_ref, b_ref, r_ref, g_ref, bt_ref,
                         o_ref, acc_ref, *, eps):
    @pl.when(pl.program_id(1) == 0)
    def _():
        acc_ref[...] = jnp.zeros_like(acc_ref)

    acc_ref[...] += jnp.dot(x_ref[...].astype(jnp.bfloat16), w_ref[...],
                            preferred_element_type=jnp.float32)

    @pl.when(pl.program_id(1) == pl.num_programs(1) - 1)
    def _():
        y = acc_ref[...] + b_ref[...] + r_ref[...].astype(jnp.float32)
        mu = jnp.mean(y, axis=-1, keepdims=True)
        var = jnp.mean((y - mu) ** 2, axis=-1, keepdims=True)
        yn = (y - mu) * jax.lax.rsqrt(var + eps)
        o_ref[...] = (yn * g_ref[...] + bt_ref[...]).astype(o_ref.dtype)


def dense_add_ln(x2d, w_bf16, b, res2d, gamma, beta, *, eps=1e-12,
                 tm_t=1024, tk_t=512):
    """y = LayerNorm(x @ w + b + res); LN needs a full row -> no N tiling."""
    M, K = x2d.shape
    _, N = w_bf16.shape
    tm = _tile(M, tm_t, 8)
    tk = _tile_lane(K, tk_t)
    return pl.pallas_call(
        functools.partial(_dense_add_ln_kernel, eps=eps),
        out_shape=jax.ShapeDtypeStruct((M, N), jnp.bfloat16),
        grid=(M // tm, K // tk),
        in_specs=[pl.BlockSpec((tm, tk), lambda i, k: (i, k)),
                  pl.BlockSpec((tk, N), lambda i, k: (k, 0)),
                  pl.BlockSpec((1, N), lambda i, k: (0, 0)),
                  pl.BlockSpec((tm, N), lambda i, k: (i, 0)),
                  pl.BlockSpec((1, N), lambda i, k: (0, 0)),
                  pl.BlockSpec((1, N), lambda i, k: (0, 0))],
        out_specs=pl.BlockSpec((tm, N), lambda i, k: (i, 0)),
        scratch_shapes=[pltpu.VMEM((tm, N), jnp.float32)],
        compiler_params=pltpu.CompilerParams(
            dimension_semantics=("parallel", "arbitrary"),
            vmem_limit_bytes=_VMEM_LIMIT),
    )(x2d, w_bf16, b.reshape(1, N), res2d, gamma.reshape(1, N), beta.reshape(1, N))


# ---------------------------- embedding add + LayerNorm ----------------------------

def _emb_ln_kernel(w_ref, pt_ref, g_ref, b_ref, o_ref, *, eps):
    x = w_ref[0] + pt_ref[...]                 # (ts, H) + (ts, H), f32
    mu = jnp.mean(x, axis=-1, keepdims=True)
    var = jnp.mean((x - mu) ** 2, axis=-1, keepdims=True)
    xn = (x - mu) * jax.lax.rsqrt(var + eps)
    o_ref[0] = (xn * g_ref[...] + b_ref[...]).astype(o_ref.dtype)


def embed_layernorm(word3d, pos_type, gamma, beta, *, eps=1e-12, ts_t=256):
    B, S, H = word3d.shape
    ts = _tile(S, ts_t, 8)
    return pl.pallas_call(
        functools.partial(_emb_ln_kernel, eps=eps),
        out_shape=jax.ShapeDtypeStruct((B, S, H), jnp.bfloat16),
        grid=(B, S // ts),                     # 2nd parallel axis keeps both v7x cores busy
        in_specs=[pl.BlockSpec((1, ts, H), lambda b, s: (b, s, 0)),
                  pl.BlockSpec((ts, H), lambda b, s: (s, 0)),
                  pl.BlockSpec((1, H), lambda b, s: (0, 0)),
                  pl.BlockSpec((1, H), lambda b, s: (0, 0))],
        out_specs=pl.BlockSpec((1, ts, H), lambda b, s: (b, s, 0)),
        compiler_params=pltpu.CompilerParams(
            dimension_semantics=("parallel", "parallel")),
    )(word3d, pos_type, gamma.reshape(1, H), beta.reshape(1, H))


# ---------------------------- self-attention ----------------------------

def _head_attention(q, k, v, bias, scale):
    """One head: q,k,v (S, dH) bf16, bias (1, S) f32 -> (S, dH) f32 context."""
    qs = (q.astype(jnp.float32) * scale).astype(jnp.bfloat16)   # pre-scale Q: O(S*dH)
    s = jnp.dot(qs, k.T, preferred_element_type=jnp.float32) + bias
    s = s - jnp.max(s, axis=-1, keepdims=True)
    p = jnp.exp(s)
    l_inv = pl.reciprocal(jnp.sum(p, axis=-1, keepdims=True), approx=True)
    ctx = jnp.dot(p.astype(jnp.bfloat16), v, preferred_element_type=jnp.float32)
    return ctx * l_inv                                           # deferred normalization


def _attn_group_kernel(q_ref, k_ref, v_ref, bias_ref, o_ref, *, hpg, dH, scale):
    bias = bias_ref[0]                         # (1, S)
    outs = []
    for hh in range(hpg):                      # small group (typically 2 heads)
        sl = pl.ds(hh * dH, dH)
        outs.append(_head_attention(q_ref[0, :, sl], k_ref[0, :, sl],
                                    v_ref[0, :, sl], bias, scale))
    res = outs[0] if hpg == 1 else jnp.concatenate(outs, axis=-1)
    o_ref[0] = res.astype(o_ref.dtype)         # single lane-dense (S, hpg*dH) store


def _attn_full_kernel(qkv_ref, bias_ref, o_ref, *, nH, dH, scale):
    # Fallback for tiny H where 128-lane head groups are impossible.
    H = nH * dH
    bias = bias_ref[0]
    outs = []
    for h in range(nH):
        q = qkv_ref[0, :, pl.ds(h * dH, dH)]
        k = qkv_ref[0, :, pl.ds(H + h * dH, dH)]
        v = qkv_ref[0, :, pl.ds(2 * H + h * dH, dH)]
        outs.append(_head_attention(q, k, v, bias, scale))
    o_ref[0] = jnp.concatenate(outs, axis=-1).astype(o_ref.dtype)


def attention(qkv3d, bias, *, nH, dH, scale):
    """qkv3d bf16 [B, S, 3H], bias f32 [B, 1, S] -> bf16 [B, S, H]."""
    B, S, H3 = qkv3d.shape
    H = H3 // 3

    # Smallest head-group whose width is a 128-lane multiple.
    hpg = None
    for c in range(1, nH + 1):
        if nH % c == 0 and (c * dH) % 128 == 0:
            hpg = c
            break

    if hpg is None:
        # Tiny-H fallback: whole (S, 3H) slab per batch (fine at small shapes).
        return pl.pallas_call(
            functools.partial(_attn_full_kernel, nH=nH, dH=dH, scale=scale),
            out_shape=jax.ShapeDtypeStruct((B, S, H), jnp.bfloat16),
            grid=(B,),
            in_specs=[pl.BlockSpec((1, S, H3), lambda b: (b, 0, 0)),
                      pl.BlockSpec((1, 1, S), lambda b: (b, 0, 0))],
            out_specs=pl.BlockSpec((1, S, H), lambda b: (b, 0, 0)),
            compiler_params=pltpu.CompilerParams(dimension_semantics=("parallel",)),
        )(qkv3d, bias)

    gH = hpg * dH
    nG = nH // hpg
    # Q/K/V column blocks pulled straight out of the (B, S, 3H) slab.
    q_spec = pl.BlockSpec((1, S, gH), lambda b, g: (b, 0, g))
    k_spec = pl.BlockSpec((1, S, gH), lambda b, g: (b, 0, nG + g))
    v_spec = pl.BlockSpec((1, S, gH), lambda b, g: (b, 0, 2 * nG + g))
    return pl.pallas_call(
        functools.partial(_attn_group_kernel, hpg=hpg, dH=dH, scale=scale),
        out_shape=jax.ShapeDtypeStruct((B, S, H), jnp.bfloat16),
        grid=(B, nG),                          # megacore can split over B*nG
        in_specs=[q_spec, k_spec, v_spec,
                  pl.BlockSpec((1, 1, S), lambda b, g: (b, 0, 0))],
        out_specs=pl.BlockSpec((1, S, gH), lambda b, g: (b, 0, g)),
        compiler_params=pltpu.CompilerParams(
            dimension_semantics=("parallel", "parallel")),
    )(qkv3d, qkv3d, qkv3d, bias)


# ---------------------------- hidden-state averaging ----------------------------

def _avg_kernel(*refs):
    *in_refs, o_ref = refs
    acc = in_refs[0][...].astype(jnp.float32)
    for r in in_refs[1:]:
        acc = acc + r[...].astype(jnp.float32)
    o_ref[...] = acc * (1.0 / float(len(in_refs)))


def average_states(states, *, tm_t=512):
    """Mean of k bf16 [M,H] arrays -> f32 [M,H] (matches `.float()` in the ref)."""
    M, H = states[0].shape
    tm = _tile(M, tm_t, 8)
    in_spec = pl.BlockSpec((tm, H), lambda i: (i, 0))
    return pl.pallas_call(
        _avg_kernel,
        out_shape=jax.ShapeDtypeStruct((M, H), jnp.float32),
        grid=(M // tm,),
        in_specs=[in_spec] * len(states),
        out_specs=pl.BlockSpec((tm, H), lambda i: (i, 0)),
        compiler_params=pltpu.CompilerParams(dimension_semantics=("parallel",)),
    )(*states)


# ---------------------------- parameters ----------------------------

def init_params(key, *, vocab, max_pos, H, I, L):
    def norm(k, shape, dtype=jnp.float32):
        return (0.02 * jax.random.normal(k, shape, jnp.float32)).astype(dtype)

    keys = iter(jax.random.split(key, 8 + L * 16))
    params = {
        "word_emb": norm(next(keys), (vocab, H)),
        "pos_emb": norm(next(keys), (max_pos, H)),
        "type_emb": norm(next(keys), (2, H)),
        "emb_ln_g": jnp.ones((H,), jnp.float32),
        "emb_ln_b": jnp.zeros((H,), jnp.float32),
        "layers": [],
    }
    for _ in range(L):
        wq = norm(next(keys), (H, H), jnp.bfloat16)
        wk = norm(next(keys), (H, H), jnp.bfloat16)
        wv = norm(next(keys), (H, H), jnp.bfloat16)
        params["layers"].append({
            # fused QKV weight (H, 3H), bf16 MXU operands
            "wqkv": jnp.concatenate([wq, wk, wv], axis=1),
            "bqkv": jnp.zeros((3 * H,), jnp.float32),
            "wo": norm(next(keys), (H, H), jnp.bfloat16),
            "bo": jnp.zeros((H,), jnp.float32),
            "ln1_g": jnp.ones((H,), jnp.float32), "ln1_b": jnp.zeros((H,), jnp.float32),
            "wi": norm(next(keys), (H, I), jnp.bfloat16),
            "bi": jnp.zeros((I,), jnp.float32),
            "wo2": norm(next(keys), (I, H), jnp.bfloat16),
            "bo2": jnp.zeros((H,), jnp.float32),
            "ln2_g": jnp.ones((H,), jnp.float32), "ln2_b": jnp.zeros((H,), jnp.float32),
        })
    return params


# ---------------------------- forward ----------------------------

def text_encoder_forward(params, input_ids, attention_mask, *, nH, avg_last_k=4):
    B, S = input_ids.shape
    H = params["word_emb"].shape[1]
    dH = H // nH
    M = B * S
    scale = 1.0 / math.sqrt(dH)

    # Embeddings: real gather (no one-hot matmul); pos/type added in the LN kernel.
    word = jnp.take(params["word_emb"], input_ids.reshape(M), axis=0)   # (M, H) f32
    pos_type = params["pos_emb"][:S] + params["type_emb"][0]            # (S, H) f32
    emb = embed_layernorm(word.reshape(B, S, H), pos_type,
                          params["emb_ln_g"], params["emb_ln_b"])       # bf16
    emb = emb.reshape(M, H)

    # Additive attention-mask bias kept at (B, 1, S); reused per head for free.
    bias = ((1.0 - attention_mask.astype(jnp.float32)) * -1e9).reshape(B, 1, S)

    hidden_states = [emb]   # includes embedding output, like HF output_hidden_states
    x = emb
    for lyr in params["layers"]:
        qkv = dense(x, lyr["wqkv"], lyr["bqkv"])                         # (M, 3H) bf16
        ctx = attention(qkv.reshape(B, S, 3 * H), bias,
                        nH=nH, dH=dH, scale=scale).reshape(M, H)
        x1 = dense_add_ln(ctx, lyr["wo"], lyr["bo"], x,
                          lyr["ln1_g"], lyr["ln1_b"])                    # attn out + res + LN
        h1 = dense(x1, lyr["wi"], lyr["bi"], activation="gelu")          # FFN up + GELU
        x = dense_add_ln(h1, lyr["wo2"], lyr["bo2"], x1,
                         lyr["ln2_g"], lyr["ln2_b"])                     # FFN down + res + LN
        hidden_states.append(x)

    k_avg = min(avg_last_k, len(hidden_states))
    if k_avg == 1:
        out = hidden_states[-1].astype(jnp.float32)
    else:
        out = average_states(hidden_states[-k_avg:])
    return out.reshape(B, S, H).astype(jnp.float32)


# ---------------------------- main ----------------------------

if __name__ == "__main__":
    def run(name, *, B, S, H, nH, I, V, L):
        key = jax.random.PRNGKey(0)
        pkey, ikey = jax.random.split(key)
        params = init_params(pkey, vocab=V, max_pos=256, H=H, I=I, L=L)
        input_ids = jax.random.randint(ikey, (B, S), 0, V, dtype=jnp.int32)
        mask = jnp.ones((B, S), jnp.int32)
        mask = mask.at[-1, S - max(1, S // 4):].set(0)   # padded tail on last sequence

        fwd = jax.jit(functools.partial(text_encoder_forward, nH=nH, avg_last_k=4))
        out = jax.block_until_ready(fwd(params, input_ids, mask))

        assert out.shape == (B, S, H), (name, out.shape)
        assert out.dtype == jnp.float32, (name, out.dtype)
        assert bool(jnp.all(jnp.isfinite(out))), name
        return out

    # Tiny config -> exercises the full-slab attention fallback (H < 128).
    run("small", B=2, S=8, H=32, nH=2, I=64, V=128, L=2)
    # Slightly larger config -> exercises the 128-lane grouped attention path.
    run("grouped", B=2, S=16, H=128, nH=2, I=256, V=256, L=2)

    print("KERNEL_OK")
</pallas_src>

<mosaic_0001>
module attributes {stable_mosaic.version = 11 : i64} {
  func.func @_emb_ln_kernel(%arg0: i32, %arg1: i32, %arg2: memref<1x8x32xf32, #tpu.memory_space<vmem>>, %arg3: memref<8x32xf32, #tpu.memory_space<vmem>>, %arg4: memref<1x32xf32, #tpu.memory_space<vmem>>, %arg5: memref<1x32xf32, #tpu.memory_space<vmem>>, %arg6: memref<1x8x32xbf16, #tpu.memory_space<vmem>>) attributes {dimension_semantics = [#tpu.dimension_semantics<parallel>, #tpu.dimension_semantics<parallel>], iteration_bounds = array<i64: 2, 1>, scalar_prefetch = 0 : i64, scratch_operands = 0 : i64, tpu.core_type = #tpu.core_type<tc>, window_params = [{transform_indices = @transform_0, window_bounds = array<i64: 1, 8, 32>}, {transform_indices = @transform_1, window_bounds = array<i64: 8, 32>}, {pipeline_mode = #tpu.pipeline_mode<synchronous>, transform_indices = @transform_2, window_bounds = array<i64: 1, 32>}, {pipeline_mode = #tpu.pipeline_mode<synchronous>, transform_indices = @transform_3, window_bounds = array<i64: 1, 32>}, {transform_indices = @transform_4, window_bounds = array<i64: 1, 8, 32>}]} {
    %c0 = arith.constant 0 : index
    %c0_0 = arith.constant 0 : index
    %c0_1 = arith.constant 0 : index
    %0 = vector.load %arg2[%c0, %c0_0, %c0_1] : memref<1x8x32xf32, #tpu.memory_space<vmem>>, vector<1x8x32xf32>
    %1 = vector.shape_cast %0 : vector<1x8x32xf32> to vector<8x32xf32>
    %c0_2 = arith.constant 0 : index
    %c0_3 = arith.constant 0 : index
    %2 = vector.load %arg3[%c0_2, %c0_3] : memref<8x32xf32, #tpu.memory_space<vmem>>, vector<8x32xf32>
    %3 = arith.addf %1, %2 : vector<8x32xf32>
    %cst = arith.constant dense<0.000000e+00> : vector<8xf32>
    %4 = vector.multi_reduction <add>, %3, %cst [1] : vector<8x32xf32> to vector<8xf32>
    %5 = vector.shape_cast %4 : vector<8xf32> to vector<8x1xf32>
    %cst_4 = arith.constant 3.200000e+01 : f32
    %6 = vector.broadcast %cst_4 : f32 to vector<8x1xf32>
    %7 = arith.divf %5, %6 : vector<8x1xf32>
    %8 = vector.broadcast %7 : vector<8x1xf32> to vector<8x32xf32>
    %9 = arith.subf %3, %8 : vector<8x32xf32>
    %10 = arith.mulf %9, %9 : vector<8x32xf32>
    %cst_5 = arith.constant dense<0.000000e+00> : vector<8xf32>
    %11 = vector.multi_reduction <add>, %10, %cst_5 [1] : vector<8x32xf32> to vector<8xf32>
    %12 = vector.shape_cast %11 : vector<8xf32> to vector<8x1xf32>
    %cst_6 = arith.constant 3.200000e+01 : f32
    %13 = vector.broadcast %cst_6 : f32 to vector<8x1xf32>
    %14 = arith.divf %12, %13 : vector<8x1xf32>
    %15 = vector.broadcast %7 : vector<8x1xf32> to vector<8x32xf32>
    %16 = arith.subf %3, %15 : vector<8x32xf32>
    %cst_7 = arith.constant 9.99999996E-13 : f32
    %17 = vector.broadcast %cst_7 : f32 to vector<8x1xf32>
    %18 = arith.addf %14, %17 : vector<8x1xf32>
    %19 = math.rsqrt %18 : vector<8x1xf32>
    %20 = vector.broadcast %19 : vector<8x1xf32> to vector<8x32xf32>
    %21 = arith.mulf %16, %20 : vector<8x32xf32>
    %c0_8 = arith.constant 0 : index
    %c0_9 = arith.constant 0 : index
    %22 = vector.load %arg4[%c0_8, %c0_9] : memref<1x32xf32, #tpu.memory_space<vmem>>, vector<1x32xf32>
    %23 = vector.broadcast %22 : vector<1x32xf32> to vector<8x32xf32>
    %24 = arith.mulf %21, %23 : vector<8x32xf32>
    %c0_10 = arith.constant 0 : index
    %c0_11 = arith.constant 0 : index
    %25 = vector.load %arg5[%c0_10, %c0_11] : memref<1x32xf32, #tpu.memory_space<vmem>>, vector<1x32xf32>
    %26 = vector.broadcast %25 : vector<1x32xf32> to vector<8x32xf32>
    %27 = arith.addf %24, %26 : vector<8x32xf32>
    %28 = arith.truncf %27 : vector<8x32xf32> to vector<8x32xbf16>
    %c0_12 = arith.constant 0 : index
    %c0_13 = arith.constant 0 : index
    %c0_14 = arith.constant 0 : index
    %29 = vector.load %arg6[%c0_12, %c0_13, %c0_14] : memref<1x8x32xbf16, #tpu.memory_space<vmem>>, vector<1x8x32xbf16>
    %30 = vector.shape_cast %29 : vector<1x8x32xbf16> to vector<8x32xbf16>
    %31 = vector.shape_cast %28 : vector<8x32xbf16> to vector<1x8x32xbf16>
    tpu.vector_store %arg6[%c0_12, %c0_13, %c0_14], %31 {strides = array<i32>} : memref<1x8x32xbf16, #tpu.memory_space<vmem>>, vector<1x8x32xbf16>,
    return
  }
  func.func @transform_0(%arg0: i32, %arg1: i32) -> (i32, i32, i32) {
    %c0_i32 = arith.constant 0 : i32
    %c0_i32_0 = arith.constant 0 : i32
    return %arg0, %arg1, %c0_i32 : i32, i32, i32
  }
  func.func @transform_1(%arg0: i32, %arg1: i32) -> (i32, i32) {
    %c0_i32 = arith.constant 0 : i32
    %c0_i32_0 = arith.constant 0 : i32
    return %arg1, %c0_i32 : i32, i32
  }
  func.func @transform_2(%arg0: i32, %arg1: i32) -> (i32, i32) {
    %c0_i32 = arith.constant 0 : i32
    %c0_i32_0 = arith.constant 0 : i32
    %c0_i32_1 = arith.constant 0 : i32
    return %c0_i32, %c0_i32_0 : i32, i32
  }
  func.func @transform_3(%arg0: i32, %arg1: i32) -> (i32, i32) {
    %c0_i32 = arith.constant 0 : i32
    %c0_i32_0 = arith.constant 0 : i32
    %c0_i32_1 = arith.constant 0 : i32
    return %c0_i32, %c0_i32_0 : i32, i32
  }
  func.func @transform_4(%arg0: i32, %arg1: i32) -> (i32, i32, i32) {
    %c0_i32 = arith.constant 0 : i32
    %c0_i32_0 = arith.constant 0 : i32
    return %arg0, %arg1, %c0_i32 : i32, i32, i32
  }
}

module attributes {stable_mosaic.version = 11 : i64} {
  func.func @_dense_kernel(%arg0: i32, %arg1: i32, %arg2: i32, %arg3: memref<16x32xbf16, #tpu.memory_space<vmem>>, %arg4: memref<32x96xbf16, #tpu.memory_space<vmem>>, %arg5: memref<1x96xf32, #tpu.memory_space<vmem>>, %arg6: memref<16x96xbf16, #tpu.memory_space<vmem>>, %arg7: memref<16x96xf32, #tpu.memory_space<vmem>>) attributes {dimension_semantics = [#tpu.dimension_semantics<parallel>, #tpu.dimension_semantics<parallel>, #tpu.dimension_semantics<arbitrary>], iteration_bounds = array<i64: 1, 1, 1>, scalar_prefetch = 0 : i64, scratch_operands = 1 : i64, tpu.core_type = #tpu.core_type<tc>, window_params = [{transform_indices = @transform_0, window_bounds = array<i64: 16, 32>}, {transform_indices = @transform_1, window_bounds = array<i64: 32, 96>}, {transform_indices = @transform_2, window_bounds = array<i64: 1, 96>}, {transform_indices = @transform_3, window_bounds = array<i64: 16, 96>}]} {
    %c0_i32 = arith.constant 0 : i32
    %0 = arith.cmpi eq, %arg2, %c0_i32 : i32
    %1 = arith.extui %0 : i1 to i32
    %c0_i32_0 = arith.constant 0 : i32
    %2 = arith.cmpi ne, %1, %c0_i32_0 : i32
    scf.if %2 {
      %cst_10 = arith.constant 0.000000e+00 : f32
      %12 = vector.broadcast %cst_10 : f32 to vector<16x96xf32>
      %c0_11 = arith.constant 0 : index
      %c0_12 = arith.constant 0 : index
      %13 = vector.load %arg7[%c0_11, %c0_12] : memref<16x96xf32, #tpu.memory_space<vmem>>, vector<16x96xf32>
      tpu.vector_store %arg7[%c0_11, %c0_12], %12 {strides = array<i32>} : memref<16x96xf32, #tpu.memory_space<vmem>>, vector<16x96xf32>,
    } else {
    }
    %c0 = arith.constant 0 : index
    %c0_1 = arith.constant 0 : index
    %3 = vector.load %arg7[%c0, %c0_1] : memref<16x96xf32, #tpu.memory_space<vmem>>, vector<16x96xf32>
    %c0_2 = arith.constant 0 : index
    %c0_3 = arith.constant 0 : index
    %4 = vector.load %arg3[%c0_2, %c0_3] : memref<16x32xbf16, #tpu.memory_space<vmem>>, vector<16x32xbf16>
    %c0_4 = arith.constant 0 : index
    %c0_5 = arith.constant 0 : index
    %5 = vector.load %arg4[%c0_4, %c0_5] : memref<32x96xbf16, #tpu.memory_space<vmem>>, vector<32x96xbf16>
    %cst = arith.constant dense<0.000000e+00> : vector<16x96xf32>
    %6 = tpu.matmul %4, %5, %cst {dimension_numbers = #tpu.dot_dimension_numbers<[1], [0], [0], [1], [0, 0, 1, 1], [], []>} : vector<16x32xbf16>, vector<32x96xbf16>, vector<16x96xf32> -> vector<16x96xf32>
    %7 = arith.addf %3, %6 : vector<16x96xf32>
    %c0_6 = arith.constant 0 : index
    %c0_7 = arith.constant 0 : index
    %8 = vector.load %arg7[%c0_6, %c0_7] : memref<16x96xf32, #tpu.memory_space<vmem>>, vector<16x96xf32>
    tpu.vector_store %arg7[%c0_6, %c0_7], %7 {strides = array<i32>} : memref<16x96xf32, #tpu.memory_space<vmem>>, vector<16x96xf32>,
    %c0_i32_8 = arith.constant 0 : i32
    %9 = arith.cmpi eq, %arg2, %c0_i32_8 : i32
    %10 = arith.extui %9 : i1 to i32
    %c0_i32_9 = arith.constant 0 : i32
    %11 = arith.cmpi ne, %10, %c0_i32_9 : i32
    scf.if %11 {
      %c0_10 = arith.constant 0 : index
      %c0_11 = arith.constant 0 : index
      %12 = vector.load %arg7[%c0_10, %c0_11] : memref<16x96xf32, #tpu.memory_space<vmem>>, vector<16x96xf32>
      %c0_12 = arith.constant 0 : index
      %c0_13 = arith.constant 0 : index
      %13 = vector.load %arg5[%c0_12, %c0_13] : memref<1x96xf32, #tpu.memory_space<vmem>>, vector<1x96xf32>
      %14 = vector.broadcast %13 : vector<1x96xf32> to vector<16x96xf32>
      %15 = arith.addf %12, %14 : vector<16x96xf32>
      %16 = arith.truncf %15 : vector<16x96xf32> to vector<16x96xbf16>
      %c0_14 = arith.constant 0 : index
      %c0_15 = arith.constant 0 : index
      %17 = vector.load %arg6[%c0_14, %c0_15] : memref<16x96xbf16, #tpu.memory_space<vmem>>, vector<16x96xbf16>
      tpu.vector_store %arg6[%c0_14, %c0_15], %16 {strides = array<i32>} : memref<16x96xbf16, #tpu.memory_space<vmem>>, vector<16x96xbf16>,
    } else {
    }
    return
  }
  func.func @transform_0(%arg0: i32, %arg1: i32, %arg2: i32) -> (i32, i32) {
    %c0_i32 = arith.constant 0 : i32
    return %arg0, %arg2 : i32, i32
  }
  func.func @transform_1(%arg0: i32, %arg1: i32, %arg2: i32) -> (i32, i32) {
    %c0_i32 = arith.constant 0 : i32
    return %arg2, %arg1 : i32, i32
  }
  func.func @transform_2(%arg0: i32, %arg1: i32, %arg2: i32) -> (i32, i32) {
    %c0_i32 = arith.constant 0 : i32
    %c0_i32_0 = arith.constant 0 : i32
    return %c0_i32, %arg1 : i32, i32
  }
  func.func @transform_3(%arg0: i32, %arg1: i32, %arg2: i32) -> (i32, i32) {
    %c0_i32 = arith.constant 0 : i32
    return %arg0, %arg1 : i32, i32
  }
}

module attributes {stable_mosaic.version = 11 : i64} {
  func.func @_attn_full_kernel(%arg0: i32, %arg1: memref<1x8x96xbf16, #tpu.memory_space<vmem>>, %arg2: memref<1x1x8xf32, #tpu.memory_space<vmem>>, %arg3: memref<1x8x32xbf16, #tpu.memory_space<vmem>>) attributes {dimension_semantics = [#tpu.dimension_semantics<parallel>], iteration_bounds = array<i64: 2>, scalar_prefetch = 0 : i64, scratch_operands = 0 : i64, tpu.core_type = #tpu.core_type<tc>, window_params = [{transform_indices = @transform_0, window_bounds = array<i64: 1, 8, 96>}, {transform_indices = @transform_1, window_bounds = array<i64: 1, 1, 8>}, {transform_indices = @transform_2, window_bounds = array<i64: 1, 8, 32>}]} {
    %c0 = arith.constant 0 : index
    %c0_0 = arith.constant 0 : index
    %c0_1 = arith.constant 0 : index
    %0 = vector.load %arg2[%c0, %c0_0, %c0_1] : memref<1x1x8xf32, #tpu.memory_space<vmem>>, vector<1x1x8xf32>
    %1 = vector.shape_cast %0 : vector<1x1x8xf32> to vector<1x8xf32>
    %c0_2 = arith.constant 0 : index
    %c0_3 = arith.constant 0 : index
    %c0_4 = arith.constant 0 : index
    %2 = vector.load %arg1[%c0_2, %c0_3, %c0_4] : memref<1x8x96xbf16, #tpu.memory_space<vmem>>, vector<1x8x16xbf16>
    %3 = vector.shape_cast %2 : vector<1x8x16xbf16> to vector<8x16xbf16>
    %c0_5 = arith.constant 0 : index
    %c0_6 = arith.constant 0 : index
    %c32 = arith.constant 32 : index
    %4 = vector.load %arg1[%c0_5, %c0_6, %c32] : memref<1x8x96xbf16, #tpu.memory_space<vmem>>, vector<1x8x16xbf16>
    %5 = vector.shape_cast %4 : vector<1x8x16xbf16> to vector<8x16xbf16>
    %c0_7 = arith.constant 0 : index
    %c0_8 = arith.constant 0 : index
    %c64 = arith.constant 64 : index
    %6 = vector.load %arg1[%c0_7, %c0_8, %c64] : memref<1x8x96xbf16, #tpu.memory_space<vmem>>, vector<1x8x16xbf16>
    %7 = vector.shape_cast %6 : vector<1x8x16xbf16> to vector<8x16xbf16>
    %8 = arith.extf %3 : vector<8x16xbf16> to vector<8x16xf32>
    %cst = arith.constant 2.500000e-01 : f32
    %9 = vector.broadcast %cst : f32 to vector<8x16xf32>
    %10 = arith.mulf %8, %9 : vector<8x16xf32>
    %11 = arith.truncf %10 : vector<8x16xf32> to vector<8x16xbf16>
    %12 = tpu.transpose %5, [1, 0] : vector<8x16xbf16> -> vector<16x8xbf16>
    %cst_9 = arith.constant dense<0.000000e+00> : vector<8x8xf32>
    %13 = tpu.matmul %11, %12, %cst_9 {dimension_numbers = #tpu.dot_dimension_numbers<[1], [0], [0], [1], [0, 0, 1, 1], [], []>} : vector<8x16xbf16>, vector<16x8xbf16>, vector<8x8xf32> -> vector<8x8xf32>
    %14 = vector.broadcast %1 : vector<1x8xf32> to vector<8x8xf32>
    %15 = arith.addf %13, %14 : vector<8x8xf32>
    %cst_10 = arith.constant dense<0xFF800000> : vector<8xf32>
    %16 = vector.multi_reduction <maximumf>, %15, %cst_10 [1] : vector<8x8xf32> to vector<8xf32>
    %17 = vector.shape_cast %16 : vector<8xf32> to vector<8x1xf32>
    %18 = vector.broadcast %17 : vector<8x1xf32> to vector<8x8xf32>
    %19 = arith.subf %15, %18 : vector<8x8xf32>
    %20 = math.exp %19 : vector<8x8xf32>
    %cst_11 = arith.constant dense<0.000000e+00> : vector<8xf32>
    %21 = vector.multi_reduction <add>, %20, %cst_11 [1] : vector<8x8xf32> to vector<8xf32>
    %22 = vector.shape_cast %21 : vector<8xf32> to vector<8x1xf32>
    %23 = tpu.reciprocal %22 {approx = true} : vector<8x1xf32> -> vector<8x1xf32>
    %24 = arith.truncf %20 : vector<8x8xf32> to vector<8x8xbf16>
    %cst_12 = arith.constant dense<0.000000e+00> : vector<8x16xf32>
    %25 = tpu.matmul %24, %7, %cst_12 {dimension_numbers = #tpu.dot_dimension_numbers<[1], [0], [0], [1], [0, 0, 1, 1], [], []>} : vector<8x8xbf16>, vector<8x16xbf16>, vector<8x16xf32> -> vector<8x16xf32>
    %26 = vector.broadcast %23 : vector<8x1xf32> to vector<8x16xf32>
    %27 = arith.mulf %25, %26 : vector<8x16xf32>
    %c0_13 = arith.constant 0 : index
    %c0_14 = arith.constant 0 : index
    %c16 = arith.constant 16 : index
    %28 = vector.load %arg1[%c0_13, %c0_14, %c16] : memref<1x8x96xbf16, #tpu.memory_space<vmem>>, vector<1x8x16xbf16>
    %29 = vector.shape_cast %28 : vector<1x8x16xbf16> to vector<8x16xbf16>
    %c0_15 = arith.constant 0 : index
    %c0_16 = arith.constant 0 : index
    %c48 = arith.constant 48 : index
    %30 = vector.load %arg1[%c0_15, %c0_16, %c48] : memref<1x8x96xbf16, #tpu.memory_space<vmem>>, vector<1x8x16xbf16>
    %31 = vector.shape_cast %30 : vector<1x8x16xbf16> to vector<8x16xbf16>
    %c0_17 = arith.constant 0 : index
    %c0_18 = arith.constant 0 : index
    %c80 = arith.constant 80 : index
    %32 = vector.load %arg1[%c0_17, %c0_18, %c80] : memref<1x8x96xbf16, #tpu.memory_space<vmem>>, vector<1x8x16xbf16>
    %33 = vector.shape_cast %32 : vector<1x8x16xbf16> to vector<8x16xbf16>
    %34 = arith.extf %29 : vector<8x16xbf16> to vector<8x16xf32>
    %cst_19 = arith.constant 2.500000e-01 : f32
    %35 = vector.broadcast %cst_19 : f32 to vector<8x16xf32>
    %36 = arith.mulf %34, %35 : vector<8x16xf32>
    %37 = arith.truncf %36 : vector<8x16xf32> to vector<8x16xbf16>
    %38 = tpu.transpose %31, [1, 0] : vector<8x16xbf16> -> vector<16x8xbf16>
    %cst_20 = arith.constant dense<0.000000e+00> : vector<8x8xf32>
    %39 = tpu.matmul %37, %38, %cst_20 {dimension_numbers = #tpu.dot_dimension_numbers<[1], [0], [0], [1], [0, 0, 1, 1], [], []>} : vector<8x16xbf16>, vector<16x8xbf16>, vector<8x8xf32> -> vector<8x8xf32>
    %40 = vector.broadcast %1 : vector<1x8xf32> to vector<8x8xf32>
    %41 = arith.addf %39, %40 : vector<8x8xf32>
    %cst_21 = arith.constant dense<0xFF800000> : vector<8xf32>
    %42 = vector.multi_reduction <maximumf>, %41, %cst_21 [1] : vector<8x8xf32> to vector<8xf32>
    %43 = vector.shape_cast %42 : vector<8xf32> to vector<8x1xf32>
    %44 = vector.broadcast %43 : vector<8x1xf32> to vector<8x8xf32>
    %45 = arith.subf %41, %44 : vector<8x8xf32>
    %46 = math.exp %45 : vector<8x8xf32>
    %cst_22 = arith.constant dense<0.000000e+00> : vector<8xf32>
    %47 = vector.multi_reduction <add>, %46, %cst_22 [1] : vector<8x8xf32> to vector<8xf32>
    %48 = vector.shape_cast %47 : vector<8xf32> to vector<8x1xf32>
    %49 = tpu.reciprocal %48 {approx = true} : vector<8x1xf32> -> vector<8x1xf32>
    %50 = arith.truncf %46 : vector<8x8xf32> to vector<8x8xbf16>
    %cst_23 = arith.constant dense<0.000000e+00> : vector<8x16xf32>
    %51 = tpu.matmul %50, %33, %cst_23 {dimension_numbers = #tpu.dot_dimension_numbers<[1], [0], [0], [1], [0, 0, 1, 1], [], []>} : vector<8x8xbf16>, vector<8x16xbf16>, vector<8x16xf32> -> vector<8x16xf32>
    %52 = vector.broadcast %49 : vector<8x1xf32> to vector<8x16xf32>
    %53 = arith.mulf %51, %52 : vector<8x16xf32>
    %54 = tpu.concatenate %27, %53 in 1 : vector<8x16xf32>, vector<8x16xf32> -> vector<8x32xf32>
    %55 = arith.truncf %54 : vector<8x32xf32> to vector<8x32xbf16>
    %c0_24 = arith.constant 0 : index
    %c0_25 = arith.constant 0 : index
    %c0_26 = arith.constant 0 : index
    %56 = vector.load %arg3[%c0_24, %c0_25, %c0_26] : memref<1x8x32xbf16, #tpu.memory_space<vmem>>, vector<1x8x32xbf16>
    %57 = vector.shape_cast %56 : vector<1x8x32xbf16> to vector<8x32xbf16>
    %58 = vector.shape_cast %55 : vector<8x32xbf16> to vector<1x8x32xbf16>
    tpu.vector_store %arg3[%c0_24, %c0_25, %c0_26], %58 {strides = array<i32>} : memref<1x8x32xbf16, #tpu.memory_space<vmem>>, vector<1x8x32xbf16>,
    return
  }
  func.func @transform_0(%arg0: i32) -> (i32, i32, i32) {
    %c0_i32 = arith.constant 0 : i32
    %c0_i32_0 = arith.constant 0 : i32
    %c0_i32_1 = arith.constant 0 : i32
    return %arg0, %c0_i32, %c0_i32_0 : i32, i32, i32
  }
  func.func @transform_1(%arg0: i32) -> (i32, i32, i32) {
    %c0_i32 = arith.constant 0 : i32
    %c0_i32_0 = arith.constant 0 : i32
    %c0_i32_1 = arith.constant 0 : i32
    return %arg0, %c0_i32, %c0_i32_0 : i32, i32, i32
  }
  func.func @transform_2(%arg0: i32) -> (i32, i32, i32) {
    %c0_i32 = arith.constant 0 : i32
    %c0_i32_0 = arith.constant 0 : i32
    %c0_i32_1 = arith.constant 0 : i32
    return %arg0, %c0_i32, %c0_i32_0 : i32, i32, i32
  }
}

module attributes {stable_mosaic.version = 11 : i64} {
  func.func @_dense_add_ln_kernel(%arg0: i32, %arg1: i32, %arg2: memref<16x32xbf16, #tpu.memory_space<vmem>>, %arg3: memref<32x32xbf16, #tpu.memory_space<vmem>>, %arg4: memref<1x32xf32, #tpu.memory_space<vmem>>, %arg5: memref<16x32xbf16, #tpu.memory_space<vmem>>, %arg6: memref<1x32xf32, #tpu.memory_space<vmem>>, %arg7: memref<1x32xf32, #tpu.memory_space<vmem>>, %arg8: memref<16x32xbf16, #tpu.memory_space<vmem>>, %arg9: memref<16x32xf32, #tpu.memory_space<vmem>>) attributes {dimension_semantics = [#tpu.dimension_semantics<parallel>, #tpu.dimension_semantics<arbitrary>], iteration_bounds = array<i64: 1, 1>, scalar_prefetch = 0 : i64, scratch_operands = 1 : i64, tpu.core_type = #tpu.core_type<tc>, window_params = [{transform_indices = @transform_0, window_bounds = array<i64: 16, 32>}, {transform_indices = @transform_1, window_bounds = array<i64: 32, 32>}, {pipeline_mode = #tpu.pipeline_mode<synchronous>, transform_indices = @transform_2, window_bounds = array<i64: 1, 32>}, {transform_indices = @transform_3, window_bounds = array<i64: 16, 32>}, {pipeline_mode = #tpu.pipeline_mode<synchronous>, transform_indices = @transform_4, window_bounds = array<i64: 1, 32>}, {pipeline_mode = #tpu.pipeline_mode<synchronous>, transform_indices = @transform_5, window_bounds = array<i64: 1, 32>}, {transform_indices = @transform_6, window_bounds = array<i64: 16, 32>}]} {
    %c0_i32 = arith.constant 0 : i32
    %0 = arith.cmpi eq, %arg1, %c0_i32 : i32
    %1 = arith.extui %0 : i1 to i32
    %c0_i32_0 = arith.constant 0 : i32
    %2 = arith.cmpi ne, %1, %c0_i32_0 : i32
    scf.if %2 {
      %cst_10 = arith.constant 0.000000e+00 : f32
      %12 = vector.broadcast %cst_10 : f32 to vector<16x32xf32>
      %c0_11 = arith.constant 0 : index
      %c0_12 = arith.constant 0 : index
      %13 = vector.load %arg9[%c0_11, %c0_12] : memref<16x32xf32, #tpu.memory_space<vmem>>, vector<16x32xf32>
      tpu.vector_store %arg9[%c0_11, %c0_12], %12 {strides = array<i32>} : memref<16x32xf32, #tpu.memory_space<vmem>>, vector<16x32xf32>,
    } else {
    }
    %c0 = arith.constant 0 : index
    %c0_1 = arith.constant 0 : index
    %3 = vector.load %arg9[%c0, %c0_1] : memref<16x32xf32, #tpu.memory_space<vmem>>, vector<16x32xf32>
    %c0_2 = arith.constant 0 : index
    %c0_3 = arith.constant 0 : index
    %4 = vector.load %arg2[%c0_2, %c0_3] : memref<16x32xbf16, #tpu.memory_space<vmem>>, vector<16x32xbf16>
    %c0_4 = arith.constant 0 : index
    %c0_5 = arith.constant 0 : index
    %5 = vector.load %arg3[%c0_4, %c0_5] : memref<32x32xbf16, #tpu.memory_space<vmem>>, vector<32x32xbf16>
    %cst = arith.constant dense<0.000000e+00> : vector<16x32xf32>
    %6 = tpu.matmul %4, %5, %cst {dimension_numbers = #tpu.dot_dimension_numbers<[1], [0], [0], [1], [0, 0, 1, 1], [], []>} : vector<16x32xbf16>, vector<32x32xbf16>, vector<16x32xf32> -> vector<16x32xf32>
    %7 = arith.addf %3, %6 : vector<16x32xf32>
    %c0_6 = arith.constant 0 : index
    %c0_7 = arith.constant 0 : index
    %8 = vector.load %arg9[%c0_6, %c0_7] : memref<16x32xf32, #tpu.memory_space<vmem>>, vector<16x32xf32>
    tpu.vector_store %arg9[%c0_6, %c0_7], %7 {strides = array<i32>} : memref<16x32xf32, #tpu.memory_space<vmem>>, vector<16x32xf32>,
    %c0_i32_8 = arith.constant 0 : i32
    %9 = arith.cmpi eq, %arg1, %c0_i32_8 : i32
    %10 = arith.extui %9 : i1 to i32
    %c0_i32_9 = arith.constant 0 : i32
    %11 = arith.cmpi ne, %10, %c0_i32_9 : i32
    scf.if %11 {
      %c0_10 = arith.constant 0 : index
      %c0_11 = arith.constant 0 : index
      %12 = vector.load %arg9[%c0_10, %c0_11] : memref<16x32xf32, #tpu.memory_space<vmem>>, vector<16x32xf32>
      %c0_12 = arith.constant 0 : index
      %c0_13 = arith.constant 0 : index
      %13 = vector.load %arg4[%c0_12, %c0_13] : memref<1x32xf32, #tpu.memory_space<vmem>>, vector<1x32xf32>
      %14 = vector.broadcast %13 : vector<1x32xf32> to vector<16x32xf32>
      %15 = arith.addf %12, %14 : vector<16x32xf32>
      %c0_14 = arith.constant 0 : index
      %c0_15 = arith.constant 0 : index
      %16 = vector.load %arg5[%c0_14, %c0_15] : memref<16x32xbf16, #tpu.memory_space<vmem>>, vector<16x32xbf16>
      %17 = arith.extf %16 : vector<16x32xbf16> to vector<16x32xf32>
      %18 = arith.addf %15, %17 : vector<16x32xf32>
      %cst_16 = arith.constant dense<0.000000e+00> : vector<16xf32>
      %19 = vector.multi_reduction <add>, %18, %cst_16 [1] : vector<16x32xf32> to vector<16xf32>
      %20 = vector.shape_cast %19 : vector<16xf32> to vector<16x1xf32>
      %cst_17 = arith.constant 3.200000e+01 : f32
      %21 = vector.broadcast %cst_17 : f32 to vector<16x1xf32>
      %22 = arith.divf %20, %21 : vector<16x1xf32>
      %23 = vector.broadcast %22 : vector<16x1xf32> to vector<16x32xf32>
      %24 = arith.subf %18, %23 : vector<16x32xf32>
      %25 = arith.mulf %24, %24 : vector<16x32xf32>
      %cst_18 = arith.constant dense<0.000000e+00> : vector<16xf32>
      %26 = vector.multi_reduction <add>, %25, %cst_18 [1] : vector<16x32xf32> to vector<16xf32>
      %27 = vector.shape_cast %26 : vector<16xf32> to vector<16x1xf32>
      %cst_19 = arith.constant 3.200000e+01 : f32
      %28 = vector.broadcast %cst_19 : f32 to vector<16x1xf32>
      %29 = arith.divf %27, %28 : vector<16x1xf32>
      %30 = vector.broadcast %22 : vector<16x1xf32> to vector<16x32xf32>
      %31 = arith.subf %18, %30 : vector<16x32xf32>
      %cst_20 = arith.constant 9.99999996E-13 : f32
      %32 = vector.broadcast %cst_20 : f32 to vector<16x1xf32>
      %33 = arith.addf %29, %32 : vector<16x1xf32>
      %34 = math.rsqrt %33 : vector<16x1xf32>
      %35 = vector.broadcast %34 : vector<16x1xf32> to vector<16x32xf32>
      %36 = arith.mulf %31, %35 : vector<16x32xf32>
      %c0_21 = arith.constant 0 : index
      %c0_22 = arith.constant 0 : index
      %37 = vector.load %arg6[%c0_21, %c0_22] : memref<1x32xf32, #tpu.memory_space<vmem>>, vector<1x32xf32>
      %38 = vector.broadcast %37 : vector<1x32xf32> to vector<16x32xf32>
      %39 = arith.mulf %36, %38 : vector<16x32xf32>
      %c0_23 = arith.constant 0 : index
      %c0_24 = arith.constant 0 : index
      %40 = vector.load %arg7[%c0_23, %c0_24] : memref<1x32xf32, #tpu.memory_space<vmem>>, vector<1x32xf32>
      %41 = vector.broadcast %40 : vector<1x32xf32> to vector<16x32xf32>
      %42 = arith.addf %39, %41 : vector<16x32xf32>
      %43 = arith.truncf %42 : vector<16x32xf32> to vector<16x32xbf16>
      %c0_25 = arith.constant 0 : index
      %c0_26 = arith.constant 0 : index
      %44 = vector.load %arg8[%c0_25, %c0_26] : memref<16x32xbf16, #tpu.memory_space<vmem>>, vector<16x32xbf16>
      tpu.vector_store %arg8[%c0_25, %c0_26], %43 {strides = array<i32>} : memref<16x32xbf16, #tpu.memory_space<vmem>>, vector<16x32xbf16>,
    } else {
    }
    return
  }
  func.func @transform_0(%arg0: i32, %arg1: i32) -> (i32, i32) {
    %c0_i32 = arith.constant 0 : i32
    return %arg0, %arg1 : i32, i32
  }
  func.func @transform_1(%arg0: i32, %arg1: i32) -> (i32, i32) {
    %c0_i32 = arith.constant 0 : i32
    %c0_i32_0 = arith.constant 0 : i32
    return %arg1, %c0_i32 : i32, i32
  }
  func.func @transform_2(%arg0: i32, %arg1: i32) -> (i32, i32) {
    %c0_i32 = arith.constant 0 : i32
    %c0_i32_0 = arith.constant 0 : i32
    %c0_i32_1 = arith.constant 0 : i32
    return %c0_i32, %c0_i32_0 : i32, i32
  }
  func.func @transform_3(%arg0: i32, %arg1: i32) -> (i32, i32) {
    %c0_i32 = arith.constant 0 : i32
    %c0_i32_0 = arith.constant 0 : i32
    return %arg0, %c0_i32 : i32, i32
  }
  func.func @transform_4(%arg0: i32, %arg1: i32) -> (i32, i32) {
    %c0_i32 = arith.constant 0 : i32
    %c0_i32_0 = arith.constant 0 : i32
    %c0_i32_1 = arith.constant 0 : i32
    return %c0_i32, %c0_i32_0 : i32, i32
  }
  func.func @transform_5(%arg0: i32, %arg1: i32) -> (i32, i32) {
    %c0_i32 = arith.constant 0 : i32
    %c0_i32_0 = arith.constant 0 : i32
    %c0_i32_1 = arith.constant 0 : i32
    return %c0_i32, %c0_i32_0 : i32, i32
  }
  func.func @transform_6(%arg0: i32, %arg1: i32) -> (i32, i32) {
    %c0_i32 = arith.constant 0 : i32
    %c0_i32_0 = arith.constant 0 : i32
    return %arg0, %c0_i32 : i32, i32
  }
}

module attributes {stable_mosaic.version = 11 : i64} {
  func.func @_dense_kernel(%arg0: i32, %arg1: i32, %arg2: i32, %arg3: memref<16x32xbf16, #tpu.memory_space<vmem>>, %arg4: memref<32x64xbf16, #tpu.memory_space<vmem>>, %arg5: memref<1x64xf32, #tpu.memory_space<vmem>>, %arg6: memref<16x64xbf16, #tpu.memory_space<vmem>>, %arg7: memref<16x64xf32, #tpu.memory_space<vmem>>) attributes {dimension_semantics = [#tpu.dimension_semantics<parallel>, #tpu.dimension_semantics<parallel>, #tpu.dimension_semantics<arbitrary>], iteration_bounds = array<i64: 1, 1, 1>, scalar_prefetch = 0 : i64, scratch_operands = 1 : i64, tpu.core_type = #tpu.core_type<tc>, window_params = [{transform_indices = @transform_0, window_bounds = array<i64: 16, 32>}, {transform_indices = @transform_1, window_bounds = array<i64: 32, 64>}, {transform_indices = @transform_2, window_bounds = array<i64: 1, 64>}, {transform_indices = @transform_3, window_bounds = array<i64: 16, 64>}]} {
    %c0_i32 = arith.constant 0 : i32
    %0 = arith.cmpi eq, %arg2, %c0_i32 : i32
    %1 = arith.extui %0 : i1 to i32
    %c0_i32_0 = arith.constant 0 : i32
    %2 = arith.cmpi ne, %1, %c0_i32_0 : i32
    scf.if %2 {
      %cst_10 = arith.constant 0.000000e+00 : f32
      %12 = vector.broadcast %cst_10 : f32 to vector<16x64xf32>
      %c0_11 = arith.constant 0 : index
      %c0_12 = arith.constant 0 : index
      %13 = vector.load %arg7[%c0_11, %c0_12] : memref<16x64xf32, #tpu.memory_space<vmem>>, vector<16x64xf32>
      tpu.vector_store %arg7[%c0_11, %c0_12], %12 {strides = array<i32>} : memref<16x64xf32, #tpu.memory_space<vmem>>, vector<16x64xf32>,
    } else {
    }
    %c0 = arith.constant 0 : index
    %c0_1 = arith.constant 0 : index
    %3 = vector.load %arg7[%c0, %c0_1] : memref<16x64xf32, #tpu.memory_space<vmem>>, vector<16x64xf32>
    %c0_2 = arith.constant 0 : index
    %c0_3 = arith.constant 0 : index
    %4 = vector.load %arg3[%c0_2, %c0_3] : memref<16x32xbf16, #tpu.memory_space<vmem>>, vector<16x32xbf16>
    %c0_4 = arith.constant 0 : index
    %c0_5 = arith.constant 0 : index
    %5 = vector.load %arg4[%c0_4, %c0_5] : memref<32x64xbf16, #tpu.memory_space<vmem>>, vector<32x64xbf16>
    %cst = arith.constant dense<0.000000e+00> : vector<16x64xf32>
    %6 = tpu.matmul %4, %5, %cst {dimension_numbers = #tpu.dot_dimension_numbers<[1], [0], [0], [1], [0, 0, 1, 1], [], []>} : vector<16x32xbf16>, vector<32x64xbf16>, vector<16x64xf32> -> vector<16x64xf32>
    %7 = arith.addf %3, %6 : vector<16x64xf32>
    %c0_6 = arith.constant 0 : index
    %c0_7 = arith.constant 0 : index
    %8 = vector.load %arg7[%c0_6, %c0_7] : memref<16x64xf32, #tpu.memory_space<vmem>>, vector<16x64xf32>
    tpu.vector_store %arg7[%c0_6, %c0_7], %7 {strides = array<i32>} : memref<16x64xf32, #tpu.memory_space<vmem>>, vector<16x64xf32>,
    %c0_i32_8 = arith.constant 0 : i32
    %9 = arith.cmpi eq, %arg2, %c0_i32_8 : i32
    %10 = arith.extui %9 : i1 to i32
    %c0_i32_9 = arith.constant 0 : i32
    %11 = arith.cmpi ne, %10, %c0_i32_9 : i32
    scf.if %11 {
      %c0_10 = arith.constant 0 : index
      %c0_11 = arith.constant 0 : index
      %12 = vector.load %arg7[%c0_10, %c0_11] : memref<16x64xf32, #tpu.memory_space<vmem>>, vector<16x64xf32>
      %c0_12 = arith.constant 0 : index
      %c0_13 = arith.constant 0 : index
      %13 = vector.load %arg5[%c0_12, %c0_13] : memref<1x64xf32, #tpu.memory_space<vmem>>, vector<1x64xf32>
      %14 = vector.broadcast %13 : vector<1x64xf32> to vector<16x64xf32>
      %15 = arith.addf %12, %14 : vector<16x64xf32>
      %16 = arith.mulf %15, %15 : vector<16x64xf32>
      %17 = arith.mulf %15, %16 : vector<16x64xf32>
      %cst_14 = arith.constant 4.471500e-02 : f32
      %18 = vector.broadcast %cst_14 : f32 to vector<16x64xf32>
      %19 = arith.mulf %18, %17 : vector<16x64xf32>
      %20 = arith.addf %15, %19 : vector<16x64xf32>
      %cst_15 = arith.constant 0.797884583 : f32
      %21 = vector.broadcast %cst_15 : f32 to vector<16x64xf32>
      %22 = arith.mulf %21, %20 : vector<16x64xf32>
      %23 = math.tanh %22 : vector<16x64xf32>
      %cst_16 = arith.constant 1.000000e+00 : f32
      %24 = vector.broadcast %cst_16 : f32 to vector<16x64xf32>
      %25 = arith.addf %24, %23 : vector<16x64xf32>
      %cst_17 = arith.constant 5.000000e-01 : f32
      %26 = vector.broadcast %cst_17 : f32 to vector<16x64xf32>
      %27 = arith.mulf %26, %25 : vector<16x64xf32>
      %28 = arith.mulf %15, %27 : vector<16x64xf32>
      %29 = arith.truncf %28 : vector<16x64xf32> to vector<16x64xbf16>
      %c0_18 = arith.constant 0 : index
      %c0_19 = arith.constant 0 : index
      %30 = vector.load %arg6[%c0_18, %c0_19] : memref<16x64xbf16, #tpu.memory_space<vmem>>, vector<16x64xbf16>
      tpu.vector_store %arg6[%c0_18, %c0_19], %29 {strides = array<i32>} : memref<16x64xbf16, #tpu.memory_space<vmem>>, vector<16x64xbf16>,
    } else {
    }
    return
  }
  func.func @transform_0(%arg0: i32, %arg1: i32, %arg2: i32) -> (i32, i32) {
    %c0_i32 = arith.constant 0 : i32
    return %arg0, %arg2 : i32, i32
  }
  func.func @transform_1(%arg0: i32, %arg1: i32, %arg2: i32) -> (i32, i32) {
    %c0_i32 = arith.constant 0 : i32
    return %arg2, %arg1 : i32, i32
  }
  func.func @transform_2(%arg0: i32, %arg1: i32, %arg2: i32) -> (i32, i32) {
    %c0_i32 = arith.constant 0 : i32
    %c0_i32_0 = arith.constant 0 : i32
    return %c0_i32, %arg1 : i32, i32
  }
  func.func @transform_3(%arg0: i32, %arg1: i32, %arg2: i32) -> (i32, i32) {
    %c0_i32 = arith.constant 0 : i32
    return %arg0, %arg1 : i32, i32
  }
}

module attributes {stable_mosaic.version = 11 : i64} {
  func.func @_avg_kernel(%arg0: i32, %arg1: memref<16x32xbf16, #tpu.memory_space<vmem>>, %arg2: memref<16x32xbf16, #tpu.memory_space<vmem>>, %arg3: memref<16x32xbf16, #tpu.memory_space<vmem>>, %arg4: memref<16x32xf32, #tpu.memory_space<vmem>>) attributes {dimension_semantics = [#tpu.dimension_semantics<parallel>], iteration_bounds = array<i64: 1>, scalar_prefetch = 0 : i64, scratch_operands = 0 : i64, tpu.core_type = #tpu.core_type<tc>, window_params = [{transform_indices = @transform_0, window_bounds = array<i64: 16, 32>}, {transform_indices = @transform_1, window_bounds = array<i64: 16, 32>}, {transform_indices = @transform_2, window_bounds = array<i64: 16, 32>}, {transform_indices = @transform_3, window_bounds = array<i64: 16, 32>}]} {
    %c0 = arith.constant 0 : index
    %c0_0 = arith.constant 0 : index
    %0 = vector.load %arg1[%c0, %c0_0] : memref<16x32xbf16, #tpu.memory_space<vmem>>, vector<16x32xbf16>
    %1 = arith.extf %0 : vector<16x32xbf16> to vector<16x32xf32>
    %c0_1 = arith.constant 0 : index
    %c0_2 = arith.constant 0 : index
    %2 = vector.load %arg2[%c0_1, %c0_2] : memref<16x32xbf16, #tpu.memory_space<vmem>>, vector<16x32xbf16>
    %3 = arith.extf %2 : vector<16x32xbf16> to vector<16x32xf32>
    %4 = arith.addf %1, %3 : vector<16x32xf32>
    %c0_3 = arith.constant 0 : index
    %c0_4 = arith.constant 0 : index
    %5 = vector.load %arg3[%c0_3, %c0_4] : memref<16x32xbf16, #tpu.memory_space<vmem>>, vector<16x32xbf16>
    %6 = arith.extf %5 : vector<16x32xbf16> to vector<16x32xf32>
    %7 = arith.addf %4, %6 : vector<16x32xf32>
    %cst = arith.constant 0.333333343 : f32
    %8 = vector.broadcast %cst : f32 to vector<16x32xf32>
    %9 = arith.mulf %7, %8 : vector<16x32xf32>
    %c0_5 = arith.constant 0 : index
    %c0_6 = arith.constant 0 : index
    %10 = vector.load %arg4[%c0_5, %c0_6] : memref<16x32xf32, #tpu.memory_space<vmem>>, vector<16x32xf32>
    tpu.vector_store %arg4[%c0_5, %c0_6], %9 {strides = array<i32>} : memref<16x32xf32, #tpu.memory_space<vmem>>, vector<16x32xf32>,
    return
  }
  func.func @transform_0(%arg0: i32) -> (i32, i32) {
    %c0_i32 = arith.constant 0 : i32
    %c0_i32_0 = arith.constant 0 : i32
    return %arg0, %c0_i32 : i32, i32
  }
  func.func @transform_1(%arg0: i32) -> (i32, i32) {
    %c0_i32 = arith.constant 0 : i32
    %c0_i32_0 = arith.constant 0 : i32
    return %arg0, %c0_i32 : i32, i32
  }
  func.func @transform_2(%arg0: i32) -> (i32, i32) {
    %c0_i32 = arith.constant 0 : i32
    %c0_i32_0 = arith.constant 0 : i32
    return %arg0, %c0_i32 : i32, i32
  }
  func.func @transform_3(%arg0: i32) -> (i32, i32) {
    %c0_i32 = arith.constant 0 : i32
    %c0_i32_0 = arith.constant 0 : i32
    return %arg0, %c0_i32 : i32, i32
  }
}

module attributes {stable_mosaic.version = 11 : i64} {
  func.func @_dense_add_ln_kernel(%arg0: i32, %arg1: i32, %arg2: memref<16x64xbf16, #tpu.memory_space<vmem>>, %arg3: memref<64x32xbf16, #tpu.memory_space<vmem>>, %arg4: memref<1x32xf32, #tpu.memory_space<vmem>>, %arg5: memref<16x32xbf16, #tpu.memory_space<vmem>>, %arg6: memref<1x32xf32, #tpu.memory_space<vmem>>, %arg7: memref<1x32xf32, #tpu.memory_space<vmem>>, %arg8: memref<16x32xbf16, #tpu.memory_space<vmem>>, %arg9: memref<16x32xf32, #tpu.memory_space<vmem>>) attributes {dimension_semantics = [#tpu.dimension_semantics<parallel>, #tpu.dimension_semantics<arbitrary>], iteration_bounds = array<i64: 1, 1>, scalar_prefetch = 0 : i64, scratch_operands = 1 : i64, tpu.core_type = #tpu.core_type<tc>, window_params = [{transform_indices = @transform_0, window_bounds = array<i64: 16, 64>}, {transform_indices = @transform_1, window_bounds = array<i64: 64, 32>}, {pipeline_mode = #tpu.pipeline_mode<synchronous>, transform_indices = @transform_2, window_bounds = array<i64: 1, 32>}, {transform_indices = @transform_3, window_bounds = array<i64: 16, 32>}, {pipeline_mode = #tpu.pipeline_mode<synchronous>, transform_indices = @transform_4, window_bounds = array<i64: 1, 32>}, {pipeline_mode = #tpu.pipeline_mode<synchronous>, transform_indices = @transform_5, window_bounds = array<i64: 1, 32>}, {transform_indices = @transform_6, window_bounds = array<i64: 16, 32>}]} {
    %c0_i32 = arith.constant 0 : i32
    %0 = arith.cmpi eq, %arg1, %c0_i32 : i32
    %1 = arith.extui %0 : i1 to i32
    %c0_i32_0 = arith.constant 0 : i32
    %2 = arith.cmpi ne, %1, %c0_i32_0 : i32
    scf.if %2 {
      %cst_10 = arith.constant 0.000000e+00 : f32
      %12 = vector.broadcast %cst_10 : f32 to vector<16x32xf32>
      %c0_11 = arith.constant 0 : index
      %c0_12 = arith.constant 0 : index
      %13 = vector.load %arg9[%c0_11, %c0_12] : memref<16x32xf32, #tpu.memory_space<vmem>>, vector<16x32xf32>
      tpu.vector_store %arg9[%c0_11, %c0_12], %12 {strides = array<i32>} : memref<16x32xf32, #tpu.memory_space<vmem>>, vector<16x32xf32>,
    } else {
    }
    %c0 = arith.constant 0 : index
    %c0_1 = arith.constant 0 : index
    %3 = vector.load %arg9[%c0, %c0_1] : memref<16x32xf32, #tpu.memory_space<vmem>>, vector<16x32xf32>
    %c0_2 = arith.constant 0 : index
    %c0_3 = arith.constant 0 : index
    %4 = vector.load %arg2[%c0_2, %c0_3] : memref<16x64xbf16, #tpu.memory_space<vmem>>, vector<16x64xbf16>
    %c0_4 = arith.constant 0 : index
    %c0_5 = arith.constant 0 : index
    %5 = vector.load %arg3[%c0_4, %c0_5] : memref<64x32xbf16, #tpu.memory_space<vmem>>, vector<64x32xbf16>
    %cst = arith.constant dense<0.000000e+00> : vector<16x32xf32>
    %6 = tpu.matmul %4, %5, %cst {dimension_numbers = #tpu.dot_dimension_numbers<[1], [0], [0], [1], [0, 0, 1, 1], [], []>} : vector<16x64xbf16>, vector<64x32xbf16>, vector<16x32xf32> -> vector<16x32xf32>
    %7 = arith.addf %3, %6 : vector<16x32xf32>
    %c0_6 = arith.constant 0 : index
    %c0_7 = arith.constant 0 : index
    %8 = vector.load %arg9[%c0_6, %c0_7] : memref<16x32xf32, #tpu.memory_space<vmem>>, vector<16x32xf32>
    tpu.vector_store %arg9[%c0_6, %c0_7], %7 {strides = array<i32>} : memref<16x32xf32, #tpu.memory_space<vmem>>, vector<16x32xf32>,
    %c0_i32_8 = arith.constant 0 : i32
    %9 = arith.cmpi eq, %arg1, %c0_i32_8 : i32
    %10 = arith.extui %9 : i1 to i32
    %c0_i32_9 = arith.constant 0 : i32
    %11 = arith.cmpi ne, %10, %c0_i32_9 : i32
    scf.if %11 {
      %c0_10 = arith.constant 0 : index
      %c0_11 = arith.constant 0 : index
      %12 = vector.load %arg9[%c0_10, %c0_11] : memref<16x32xf32, #tpu.memory_space<vmem>>, vector<16x32xf32>
      %c0_12 = arith.constant 0 : index
      %c0_13 = arith.constant 0 : index
      %13 = vector.load %arg4[%c0_12, %c0_13] : memref<1x32xf32, #tpu.memory_space<vmem>>, vector<1x32xf32>
      %14 = vector.broadcast %13 : vector<1x32xf32> to vector<16x32xf32>
      %15 = arith.addf %12, %14 : vector<16x32xf32>
      %c0_14 = arith.constant 0 : index
      %c0_15 = arith.constant 0 : index
      %16 = vector.load %arg5[%c0_14, %c0_15] : memref<16x32xbf16, #tpu.memory_space<vmem>>, vector<16x32xbf16>
      %17 = arith.extf %16 : vector<16x32xbf16> to vector<16x32xf32>
      %18 = arith.addf %15, %17 : vector<16x32xf32>
      %cst_16 = arith.constant dense<0.000000e+00> : vector<16xf32>
      %19 = vector.multi_reduction <add>, %18, %cst_16 [1] : vector<16x32xf32> to vector<16xf32>
      %20 = vector.shape_cast %19 : vector<16xf32> to vector<16x1xf32>
      %cst_17 = arith.constant 3.200000e+01 : f32
      %21 = vector.broadcast %cst_17 : f32 to vector<16x1xf32>
      %22 = arith.divf %20, %21 : vector<16x1xf32>
      %23 = vector.broadcast %22 : vector<16x1xf32> to vector<16x32xf32>
      %24 = arith.subf %18, %23 : vector<16x32xf32>
      %25 = arith.mulf %24, %24 : vector<16x32xf32>
      %cst_18 = arith.constant dense<0.000000e+00> : vector<16xf32>
      %26 = vector.multi_reduction <add>, %25, %cst_18 [1] : vector<16x32xf32> to vector<16xf32>
      %27 = vector.shape_cast %26 : vector<16xf32> to vector<16x1xf32>
      %cst_19 = arith.constant 3.200000e+01 : f32
      %28 = vector.broadcast %cst_19 : f32 to vector<16x1xf32>
      %29 = arith.divf %27, %28 : vector<16x1xf32>
      %30 = vector.broadcast %22 : vector<16x1xf32> to vector<16x32xf32>
      %31 = arith.subf %18, %30 : vector<16x32xf32>
      %cst_20 = arith.constant 9.99999996E-13 : f32
      %32 = vector.broadcast %cst_20 : f32 to vector<16x1xf32>
      %33 = arith.addf %29, %32 : vector<16x1xf32>
      %34 = math.rsqrt %33 : vector<16x1xf32>
      %35 = vector.broadcast %34 : vector<16x1xf32> to vector<16x32xf32>
      %36 = arith.mulf %31, %35 : vector<16x32xf32>
      %c0_21 = arith.constant 0 : index
      %c0_22 = arith.constant 0 : index
      %37 = vector.load %arg6[%c0_21, %c0_22] : memref<1x32xf32, #tpu.memory_space<vmem>>, vector<1x32xf32>
      %38 = vector.broadcast %37 : vector<1x32xf32> to vector<16x32xf32>
      %39 = arith.mulf %36, %38 : vector<16x32xf32>
      %c0_23 = arith.constant 0 : index
      %c0_24 = arith.constant 0 : index
      %40 = vector.load %arg7[%c0_23, %c0_24] : memref<1x32xf32, #tpu.memory_space<vmem>>, vector<1x32xf32>
      %41 = vector.broadcast %40 : vector<1x32xf32> to vector<16x32xf32>
      %42 = arith.addf %39, %41 : vector<16x32xf32>
      %43 = arith.truncf %42 : vector<16x32xf32> to vector<16x32xbf16>
      %c0_25 = arith.constant 0 : index
      %c0_26 = arith.constant 0 : index
      %44 = vector.load %arg8[%c0_25, %c0_26] : memref<16x32xbf16, #tpu.memory_space<vmem>>, vector<16x32xbf16>
      tpu.vector_store %arg8[%c0_25, %c0_26], %43 {strides = array<i32>} : memref<16x32xbf16, #tpu.memory_space<vmem>>, vector<16x32xbf16>,
    } else {
    }
    return
  }
  func.func @transform_0(%arg0: i32, %arg1: i32) -> (i32, i32) {
    %c0_i32 = arith.constant 0 : i32
    return %arg0, %arg1 : i32, i32
  }
  func.func @transform_1(%arg0: i32, %arg1: i32) -> (i32, i32) {
    %c0_i32 = arith.constant 0 : i32
    %c0_i32_0 = arith.constant 0 : i32
    return %arg1, %c0_i32 : i32, i32
  }
  func.func @transform_2(%arg0: i32, %arg1: i32) -> (i32, i32) {
    %c0_i32 = arith.constant 0 : i32
    %c0_i32_0 = arith.constant 0 : i32
    %c0_i32_1 = arith.constant 0 : i32
    return %c0_i32, %c0_i32_0 : i32, i32
  }
  func.func @transform_3(%arg0: i32, %arg1: i32) -> (i32, i32) {
    %c0_i32 = arith.constant 0 : i32
    %c0_i32_0 = arith.constant 0 : i32
    return %arg0, %c0_i32 : i32, i32
  }
  func.func @transform_4(%arg0: i32, %arg1: i32) -> (i32, i32) {
    %c0_i32 = arith.constant 0 : i32
    %c0_i32_0 = arith.constant 0 : i32
    %c0_i32_1 = arith.constant 0 : i32
    return %c0_i32, %c0_i32_0 : i32, i32
  }
  func.func @transform_5(%arg0: i32, %arg1: i32) -> (i32, i32) {
    %c0_i32 = arith.constant 0 : i32
    %c0_i32_0 = arith.constant 0 : i32
    %c0_i32_1 = arith.constant 0 : i32
    return %c0_i32, %c0_i32_0 : i32, i32
  }
  func.func @transform_6(%arg0: i32, %arg1: i32) -> (i32, i32) {
    %c0_i32 = arith.constant 0 : i32
    %c0_i32_0 = arith.constant 0 : i32
    return %arg0, %c0_i32 : i32, i32
  }
}

</mosaic_0001>

<llo_original>
// kernel: text_encoder_forward.12
$region0: #{text_encoder_forward.12}
  #allocation0 [shape = 'u32[]', space=smem, size = 0x4, offset = 0x4, fixed_abs, tag = 'smem constant byte address 0x4 - core index']
  #allocation1 [shape = 'u32[72,128]{1,0:T(1,128)}', space=vmem, size = 0x9000, scoped, tag = 'internal scratch']
  %s0 = inlined_call_operand.vmem [shape: f32[2,8,32], index: 0, kind: input, shape index: {}]
  %s1 = inlined_call_operand.vmem [shape: f32[8,32], index: 1, kind: input, shape index: {}]
  %s2 = inlined_call_operand.vmem [shape: f32[1,32], index: 2, kind: input, shape index: {}]
  %s3 = inlined_call_operand.vmem [shape: f32[1,32], index: 3, kind: input, shape index: {}]
  %s4 = inlined_call_operand.vmem [shape: bf16[2,8,32], index: 4, kind: output, shape index: {}]
  %s5 = sld [smem:[#allocation0]]
  $region49: #{text_encoder_forward.12} parent=0
    _
  %s7 = ssub.s32 1, %s5
  %s8 = scalar_select 0, %s7, %s5
  loop: start=0, step=1, limit=4
  $region2: #{text_encoder_forward.12} parent=0 // loop_pre_header
    _
  $region3: #{text_encoder_forward.12} parent=0 // loop_header
    %s10 = sphi 0, %s14
    %p11 = scmp.ge.s32.totalorder %s10, 4
    %s17 = sphi 0, %s29
    %s18 = sphi 0, %s25
    %s19 = sphi 0, %s17
    %s20 = sphi 0, %s18
    %s21 = sphi 0, %s19
    %s22 = sphi 0, %s20
    %s34 = sphi 0, %s36
    %s37 = sphi 0, %s34
    %s38 = sphi 0, %s37
    %s54 = sphi 0, %s38
    %s60 = sphi 0, %s62
    %s63 = sphi 0, %s60
    %s64 = sphi 0, %s63
    %s80 = sphi 0, %s64
    %s84 = sphi 0, %s84
    %s86 = sphi 0, %s84
    %s87 = sphi 0, %s86
    %s101 = sphi 0, %s87
    %s105 = sphi 0, %s105
    %s107 = sphi 0, %s105
    %s108 = sphi 0, %s107
    %s122 = sphi 0, %s108
    %s130 = sphi 0, %s132
    %s133 = sphi 0, %s130
    %s134 = sphi 0, %s133
    %s150 = sphi 0, %s134
  $region4: #{text_encoder_forward.12} parent=0 // loop_header_branch
    %13 = sbr.rel (%p11) target = $region8
  $region5: #{text_encoder_forward.12} parent=0 // loop_body
    %s15 = ssub.s32 %s10, 1
    %s16 = ssub.s32 %s10, 2
    %s23 = sadd.s32 1, %s18
    %p24 = scmp.ge.s32.totalorder %s23, 1
    %s25 = scalar_select %p24, 0, %s23
    %s26 = sadd.s32 1, %s17
    %s27 = scalar_select %p24, %s26, %s17
    %p28 = scmp.ge.s32.totalorder %s27, 2
    %s29 = scalar_select %p28, 0, %s27
    %s30 = ssub.s32 %s17, %s29
    %s31 = ssub.s32 %s18, %s25
    %s32 = sor.u32 %s30, %s31
    %p33 = scmp.eq.s32.totalorder %s32, 0
    %s35 = sadd.s32 %s34, 1
    %s36 = scalar_select %p33, %s34, %s35
    %p39 = pneg %p33
    %p40 = scmp.eq.s32.totalorder %s10, 1
    %p41 = por %p39, %p40
    %p42 = scmp.ne.s32.totalorder %s34, %s37
    %p43 = scmp.eq.s32.totalorder %s10, 0
    %p44 = por %p42, %p43
    %p45 = scmp.ne.s32.totalorder %s34, %s37
    %p46 = scmp.eq.s32.totalorder %s15, 1
    %p47 = por %p45, %p46
    %p48 = scmp.ne.s32.totalorder %s37, %s38
    %p49 = scmp.eq.s32.totalorder %s15, 0
    %p50 = por %p48, %p49
    %p51 = scmp.ne.s32.totalorder %s37, %s38
    %p52 = scmp.eq.s32.totalorder %s16, 1
    %p53 = por %p51, %p52
    %p55 = scmp.ne.s32.totalorder %s38, %s54
    %p56 = scmp.eq.s32.totalorder %s16, 0
    %p57 = por %p55, %p56
    %s58 = ssub.s32 %s18, %s25
    %p59 = scmp.eq.s32.totalorder %s58, 0
    %s61 = sadd.s32 %s60, 1
    %s62 = scalar_select %p59, %s60, %s61
    %p65 = pneg %p59
    %p66 = scmp.eq.s32.totalorder %s10, 1
    %p67 = por %p65, %p66
    %p68 = scmp.ne.s32.totalorder %s60, %s63
    %p69 = scmp.eq.s32.totalorder %s10, 0
    %p70 = por %p68, %p69
    %p71 = scmp.ne.s32.totalorder %s60, %s63
    %p72 = scmp.eq.s32.totalorder %s15, 1
    %p73 = por %p71, %p72
    %p74 = scmp.ne.s32.totalorder %s63, %s64
    %p75 = scmp.eq.s32.totalorder %s15, 0
    %p76 = por %p74, %p75
    %p77 = scmp.ne.s32.totalorder %s63, %s64
    %p78 = scmp.eq.s32.totalorder %s16, 1
    %p79 = por %p77, %p78
    %p81 = scmp.ne.s32.totalorder %s64, %s80
    %p82 = scmp.eq.s32.totalorder %s16, 0
    %p83 = por %p81, %p82
    %s85 = sadd.s32 %s84, 1
    %p88 = scmp.eq.s32.totalorder %s10, 1
    %p89 = scmp.ne.s32.totalorder %s84, %s86
    %p90 = scmp.eq.s32.totalorder %s10, 0
    %p91 = por %p89, %p90
    %p92 = scmp.ne.s32.totalorder %s84, %s86
    %p93 = scmp.eq.s32.totalorder %s15, 1
    %p94 = por %p92, %p93
    %p95 = scmp.ne.s32.totalorder %s86, %s87
    %p96 = scmp.eq.s32.totalorder %s15, 0
    %p97 = por %p95, %p96
    %p98 = scmp.ne.s32.totalorder %s86, %s87
    %p99 = scmp.eq.s32.totalorder %s16, 1
    %p100 = por %p98, %p99
    %p102 = scmp.ne.s32.totalorder %s87, %s101
    %p103 = scmp.eq.s32.totalorder %s16, 0
    %p104 = por %p102, %p103
    %s106 = sadd.s32 %s105, 1
    %p109 = scmp.eq.s32.totalorder %s10, 1
    %p110 = scmp.ne.s32.totalorder %s105, %s107
    %p111 = scmp.eq.s32.totalorder %s10, 0
    %p112 = por %p110, %p111
    %p113 = scmp.ne.s32.totalorder %s105, %s107
    %p114 = scmp.eq.s32.totalorder %s15, 1
    %p115 = por %p113, %p114
    %p116 = scmp.ne.s32.totalorder %s107, %s108
    %p117 = scmp.eq.s32.totalorder %s15, 0
    %p118 = por %p116, %p117
    %p119 = scmp.ne.s32.totalorder %s107, %s108
    %p120 = scmp.eq.s32.totalorder %s16, 1
    %p121 = por %p119, %p120
    %p123 = scmp.ne.s32.totalorder %s108, %s122
    %p124 = scmp.eq.s32.totalorder %s16, 0
    %p125 = por %p123, %p124
    %s126 = ssub.s32 %s17, %s29
    %s127 = ssub.s32 %s18, %s25
    %s128 = sor.u32 %s126, %s127
    %p129 = scmp.eq.s32.totalorder %s128, 0
    %s131 = sadd.s32 %s130, 1
    %s132 = scalar_select %p129, %s130, %s131
    %p135 = pneg %p129
    %p136 = scmp.eq.s32.totalorder %s10, 1
    %p137 = por %p135, %p136
    %p138 = scmp.ne.s32.totalorder %s130, %s133
    %p139 = scmp.eq.s32.totalorder %s10, 0
    %p140 = por %p138, %p139
    %p141 = scmp.ne.s32.totalorder %s130, %s133
    %p142 = scmp.eq.s32.totalorder %s15, 1
    %p143 = por %p141, %p142
    %p144 = scmp.ne.s32.totalorder %s133, %s134
    %p145 = scmp.eq.s32.totalorder %s15, 0
    %p146 = por %p144, %p145
    %p147 = scmp.ne.s32.totalorder %s133, %s134
    %p148 = scmp.eq.s32.totalorder %s16, 1
    %p149 = por %p147, %p148
    %p151 = scmp.ne.s32.totalorder %s134, %s150
    %p152 = scmp.eq.s32.totalorder %s16, 0
    %p153 = por %p151, %p152
    %p154 = scmp.le.s32.totalorder 1, %s10
    %p155 = scmp.lt.s32.totalorder %s10, 3
    %p156 = pnand %p154, %p155
    %p157 = pneg %p156
    // Predicated region
    $region9: #{text_encoder_forward.12} parent=5 // pred_check
      _
    $region10: #{text_encoder_forward.12} parent=5 // pred_check_branch
      %159 = sbr.rel (%p156) target = $region12
    $region11: #{text_encoder_forward.12} parent=5 // pred_region
      %s160 = ssub.s32 %s10, 1
      // Predicated region
      $region13: #{text_encoder_forward.12} parent=11 // pred_check
        %p161 = pneg %p76
      $region14: #{text_encoder_forward.12} parent=11 // pred_check_branch
        %163 = sbr.rel (%p161) target = $region16
      $region15: #{text_encoder_forward.12} parent=11 // pred_region
        %p164 = scmp.lt.s32.totalorder %s20, 0
        %s165 = scalar_select %p164, %s20, 0
        %s166 = smul.addr %s165, 8
        %s167 = scalar_lea.vmem %s1, %s166
      $region16: #{text_encoder_forward.12} parent=11 // pred_fallthru
        _
      // Predicated region
      $region17: #{text_encoder_forward.12} parent=11 // pred_check
        %p168 = pneg %p97
      $region18: #{text_encoder_forward.12} parent=11 // pred_check_branch
        %170 = sbr.rel (%p168) target = $region20
      $region19: #{text_encoder_forward.12} parent=11 // pred_region
        _
      $region20: #{text_encoder_forward.12} parent=11 // pred_fallthru
        _
      // Predicated region
      $region21: #{text_encoder_forward.12} parent=11 // pred_check
        %p171 = pneg %p118
      $region22: #{text_encoder_forward.12} parent=11 // pred_check_branch
        %173 = sbr.rel (%p171) target = $region24
      $region23: #{text_encoder_forward.12} parent=11 // pred_region
        _
      $region24: #{text_encoder_forward.12} parent=11 // pred_fallthru
        _
    $region12: #{text_encoder_forward.12} parent=5 // pred_fallthru
      _
    %p174 = scmp.lt.s32.totalorder %s10, 2
    // Predicated region
    $region25: #{text_encoder_forward.12} parent=5 // pred_check
      %p175 = pneg %p174
    $region26: #{text_encoder_forward.12} parent=5 // pred_check_branch
      %177 = sbr.rel (%p175) target = $region28
    $region27: #{text_encoder_forward.12} parent=5 // pred_region
      // Predicated region
      $region29: #{text_encoder_forward.12} parent=27 // pred_check
        %p178 = pneg %p44
      $region30: #{text_encoder_forward.12} parent=27 // pred_check_branch
        %180 = sbr.rel (%p178) target = $region32
      $region31: #{text_encoder_forward.12} parent=27 // pred_region
        %p181 = scmp.lt.s32.totalorder %s17, 1
        %s182 = scalar_select %p181, %s17, 1
        %p183 = scmp.lt.s32.totalorder %s18, 0
        %s184 = scalar_select %p183, %s18, 0
        %s185 = sadd.s32 %s184, %s182
        %s186 = smul.addr %s185, 8
        %s187 = scalar_lea.vmem %s0, %s186
      $region32: #{text_encoder_forward.12} parent=27 // pred_fallthru
        _
    $region28: #{text_encoder_forward.12} parent=5 // pred_fallthru
      _
    %p188 = scmp.le.s32.totalorder 1, %s10
    %p189 = scmp.lt.s32.totalorder %s10, 3
    %p190 = pnand %p188, %p189
    %p191 = pneg %p190
    // Predicated region
    $region33: #{text_encoder_forward.12} parent=5 // pred_check
      _
    $region34: #{text_encoder_forward.12} parent=5 // pred_check_branch
      %193 = sbr.rel (%p190) target = $region36
    $region35: #{text_encoder_forward.12} parent=5 // pred_region
      %s194 = ssub.s32 %s10, 1
      %p195 = scmp.lt.s32.totalorder %s19, 1
      %s196 = scalar_select %p195, %s19, 1
      %p197 = scmp.lt.s32.totalorder %s20, 0
      %s198 = scalar_select %p197, %s20, 0
      %s199 = sadd.s32 %s198, %s196
      %s200 = smul.addr %s199, 8
      %s201 = scalar_lea.vmem %s0, %s200
      %p202 = pneg %p50
      %p203 = pneg %p47
      %p204 = scmp.lt.s32.totalorder %s20, 0
      %s205 = scalar_select %p204, %s20, 0
      %s206 = smul.addr %s205, 8
      %s207 = scalar_lea.vmem %s1, %s206
      %p208 = pneg %p76
      %p209 = pneg %p73
      %p210 = pneg %p97
      %p211 = pneg %p94
      %p212 = pneg %p118
      %p213 = pneg %p115
      %p214 = pneg %p146
      %p215 = pneg %p143
      %p216 = scmp.lt.s32.totalorder %s19, 1
      %s217 = scalar_select %p216, %s19, 1
      %p218 = scmp.lt.s32.totalorder %s20, 0
      %s219 = scalar_select %p218, %s20, 0
      %s220 = sadd.s32 %s219, %s217
      %s221 = smul.addr %s220, 4
      %s222 = scalar_lea.vmem %s4, %s221
      %p223 = scmp.lt.s32.totalorder %s19, 1
      %s224 = scalar_select %p223, %s19, 1
      %p225 = scmp.lt.s32.totalorder %s20, 0
      %s226 = scalar_select %p225, %s20, 0
      %s227 = sadd.s32 %s226, %s224
      %s228 = smul.addr %s227, 8
      %s229 = scalar_lea.vmem %s0, %s228
      %p230 = scmp.lt.s32.totalorder %s20, 0
      %s231 = scalar_select %p230, %s20, 0
      %s232 = smul.addr %s231, 8
      %s233 = scalar_lea.vmem %s1, %s232
      %p234 = scmp.lt.s32.totalorder %s19, 1
      %s235 = scalar_select %p234, %s19, 1
      %p236 = scmp.lt.s32.totalorder %s20, 0
      %s237 = scalar_select %p236, %s20, 0
      %s238 = sadd.s32 %s237, %s235
      %s239 = smul.addr %s238, 4
      %s240 = scalar_lea.vmem %s4, %s239
      %v241 = vld [vmem:[%s229] sm:$0xff]
      %v242 = vld [vmem:[%s233] sm:$0xff]
      %v243 = vadd.f32 %v241, %v242
      %vm244 = vcmask 261120
      %v245 = vsel %vm244, %v243, 0.0
      %246 = vadd.xlane.f32.xlu0 %v245
      %v247 = vpop.xlane.xlu0 %246
      %v248 = vrcp.pop 32.0
      %v249 = vmul.f32 32.0, %v248
      %v250 = vsub.f32 1.0, %v249
      %v251 = vmul.f32 %v248, %v250
      %v252 = vadd.f32 %v248, %v251
      %vm253 = vweird.f32 %v248
      %v254 = vsel %vm253, %v248, %v252
      %v255 = vmul.f32 %v247, %v254
      %v256 = vsub.f32 %v243, %v255
      %v257 = vmul.f32 %v256, %v256
      %v258 = vsel %vm244, %v257, 0.0
      %259 = vadd.xlane.f32.xlu0 %v258
      %v260 = vpop.xlane.xlu0 %259
      %v261 = vmul.f32 %v260, %v254
      %v262 = vadd.f32 %v261, 1e-12
      %v263 = vrsqrt.pop %v262
      %v264 = vmul.f32 %v263, %v262
      %v265 = vmul.f32 %v264, %v263
      %v266 = vmul.f32 0.5, %v265
      %v267 = vsub.f32 1.5, %v266
      %v268 = vmul.f32 %v263, %v267
      %vm269 = vweird.f32 %v262
      %vm270 = vweird.f32 %v263
      %vm271 = vmor %vm269, %vm270
      %v272 = vsel %vm271, %v263, %v268
      %v273 = vmul.f32 %v256, %v272
      %v274 = vld [vmem:[%s2] sm:$0x1]
      %v276 = vperm.slane %v274, 0
      %v278 = vmul.f32 %v273, %v276
      %v279 = vld [vmem:[%s3] sm:$0x1]
      %v281 = vperm.slane %v279, 0
      %v283 = vadd.f32 %v278, %v281
      %v284 = vpack.c.bf16 %v283, %v283
      %vm285 = vcmask 257024
      %286 = vst.msk [vmem:[%s240] sm:$0xf] %vm285, %v284
      %p287 = scmp.lt.s32.totalorder %s19, 1
      %s288 = scalar_select %p287, %s19, 1
      %p289 = scmp.lt.s32.totalorder %s20, 0
      %s290 = scalar_select %p289, %s20, 0
      %s291 = sadd.s32 %s290, %s288
      %s292 = smul.addr %s291, 4
      %s293 = scalar_lea.vmem %s4, %s292
      // Predicated region
      $region37: #{text_encoder_forward.12} parent=35 // pred_check
        %p294 = pneg %p143
      $region38: #{text_encoder_forward.12} parent=35 // pred_check_branch
        %296 = sbr.rel (%p294) target = $region40
      $region39: #{text_encoder_forward.12} parent=35 // pred_region
        _
      $region40: #{text_encoder_forward.12} parent=35 // pred_fallthru
        _
    $region36: #{text_encoder_forward.12} parent=5 // pred_fallthru
      _
    %p297 = scmp.le.s32.totalorder 2, %s10
    // Predicated region
    $region41: #{text_encoder_forward.12} parent=5 // pred_check
      %p298 = pneg %p297
    $region42: #{text_encoder_forward.12} parent=5 // pred_check_branch
      %300 = sbr.rel (%p298) target = $region44
    $region43: #{text_encoder_forward.12} parent=5 // pred_region
      %s301 = ssub.s32 %s10, 2
      // Predicated region
      $region45: #{text_encoder_forward.12} parent=43 // pred_check
        %p302 = pneg %p149
      $region46: #{text_encoder_forward.12} parent=43 // pred_check_branch
        %304 = sbr.rel (%p302) target = $region48
      $region47: #{text_encoder_forward.12} parent=43 // pred_region
        %p305 = scmp.lt.s32.totalorder %s21, 1
        %s306 = scalar_select %p305, %s21, 1
        %p307 = scmp.lt.s32.totalorder %s22, 0
        %s308 = scalar_select %p307, %s22, 0
        %s309 = sadd.s32 %s308, %s306
        %s310 = smul.addr %s309, 4
        %s311 = scalar_lea.vmem %s4, %s310
      $region48: #{text_encoder_forward.12} parent=43 // pred_fallthru
        _
    $region44: #{text_encoder_forward.12} parent=5 // pred_fallthru
      _
  $region6: #{text_encoder_forward.12} parent=0 // loop_footer
    %s14 = sadd.s32 1, %s10
  $region7: #{text_encoder_forward.12} parent=0 // loop_footer_branch
    %9 = sbr.rel target = $region3
  $region8: #{text_encoder_forward.12} parent=0 // loop_exit
    _

// kernel: text_encoder_forward.13
$region0: #{text_encoder_forward.13}
  #allocation0 [shape = 'u32[]', space=smem, size = 0x4, offset = 0x4, fixed_abs, tag = 'smem constant byte address 0x4 - core index']
  #allocation1 [shape = 'u32[72,128]{1,0:T(1,128)}', space=vmem, size = 0x9000, scoped, tag = 'internal scratch']
  #allocation2 [shape = 'f32[16,96]{1,0:T(8,128)}', space=vmem, size = 0x2000, scoped, tag = 'scratch operand']
  %s0 = inlined_call_operand.vmem [shape: bf16[16,32], index: 0, kind: input, shape index: {}]
  %s1 = inlined_call_operand.vmem [shape: bf16[32,96], index: 1, kind: input, shape index: {}]
  %s2 = inlined_call_operand.vmem [shape: f32[1,96], index: 2, kind: input, shape index: {}]
  %s3 = inlined_call_operand.vmem [shape: bf16[16,96], index: 3, kind: output, shape index: {}]
  %s4 = sld [smem:[#allocation0]]
  $region30: #{text_encoder_forward.13} parent=0
    _
  %s6 = ssub.s32 1, %s4
  %s7 = scalar_select 0, %s6, %s4
  // Predicated region
  $region2: #{text_encoder_forward.13} parent=0 // pred_check
    _
  $region3: #{text_encoder_forward.13} parent=0 // pred_check_branch
    %9 = sbr.rel (0) target = $region5
  $region4: #{text_encoder_forward.13} parent=0 // pred_region
    _
  $region5: #{text_encoder_forward.13} parent=0 // pred_fallthru
    _
  // Predicated region
  $region6: #{text_encoder_forward.13} parent=0 // pred_check
    _
  $region7: #{text_encoder_forward.13} parent=0 // pred_check_branch
    %11 = sbr.rel (0) target = $region9
  $region8: #{text_encoder_forward.13} parent=0 // pred_region
    _
  $region9: #{text_encoder_forward.13} parent=0 // pred_fallthru
    _
  // Predicated region
  $region10: #{text_encoder_forward.13} parent=0 // pred_check
    _
  $region11: #{text_encoder_forward.13} parent=0 // pred_check_branch
    %13 = sbr.rel (0) target = $region13
  $region12: #{text_encoder_forward.13} parent=0 // pred_region
    _
  $region13: #{text_encoder_forward.13} parent=0 // pred_fallthru
    _
  %p15 = scmp.eq.s32.totalorder 0, 0
  // Predicated region
  $region14: #{text_encoder_forward.13} parent=0 // pred_check
    %p16 = pneg %p15
  $region15: #{text_encoder_forward.13} parent=0 // pred_check_branch
    %18 = sbr.rel (%p16) target = $region17
  $region16: #{text_encoder_forward.13} parent=0 // pred_region
    %vm19 = vcmask 785408
    %20 = vst.msk [vmem:[#allocation2] sm:$0xff] %vm19, 0.0
    %21 = vst.msk [vmem:[#allocation2 + $0x8] sm:$0xff] %vm19, 0.0
  $region17: #{text_encoder_forward.13} parent=0 // pred_fallthru
    _
  %v22 = vld [vmem:[#allocation2] sm:$0xff]
  %v23 = vld [vmem:[#allocation2 + $0x8] sm:$0xff]
  %v24 = vld [vmem:[%s0] sm:$0xf]
  %v25 = vld [vmem:[%s0 + $0x4] sm:$0xf]
  %v26 = vld [vmem:[%s1] sm:$0xf]
  %v27 = vld [vmem:[%s1 + $0x4] sm:$0xf]
  %v28 = vld [vmem:[%s1 + $0x8] sm:$0xf]
  %v29 = vld [vmem:[%s1 + $0xc] sm:$0xf]
  %v32 = vunpack.c.l.b16 %v24
  %v33 = vunpack.c.l.b16 %v25
  %v34 = vpack.c.b16 %v33, %v32
  %v39 = vunpack.c.l.b16 %v26
  %v40 = vunpack.c.l.b16 %v27
  %v41 = vunpack.c.l.b16 %v28
  %v42 = vunpack.c.l.b16 %v29
  %v43 = vpack.c.b16 %v40, %v39
  %v44 = vpack.c.b16 %v42, %v41
  %vm47 = vcmask 261120
  %v49 = vsel %vm47, %v34, 0
  %51 = vmatpush.bf16.msra.mxu0 0
  %52 = vmatpush.bf16.msra.mxu0 0
  %53 = vmatpush.bf16.msra.mxu0 0
  %54 = vmatpush.bf16.msra.mxu0 0
  %55 = vmatpush.bf16.msra.mxu0 0
  %56 = vmatpush.bf16.msra.mxu0 0
  %57 = vmatpush.bf16.msra.mxu0 %v44
  %58 = vmatpush.bf16.msra.mxu0 %v43
  %59 = vmatmul.bf16.gmra.mxu0 %v49
  %v60 = vpop.f32.mrf.mxu0
  %v61 = vadd.f32 0.0, %v60
  %v62 = vpop.f32.mrf.mxu0
  %v63 = vadd.f32 0.0, %v62
  %64 = vdwg.mxu0
  %v65 = vadd.f32 %v22, %v61
  %v66 = vadd.f32 %v23, %v63
  %vm67 = vcmask 785408
  %68 = vst.msk [vmem:[#allocation2] sm:$0xff] %vm67, %v65
  %69 = vst.msk [vmem:[#allocation2 + $0x8] sm:$0xff] %vm67, %v66
  // Predicated region
  $region18: #{text_encoder_forward.13} parent=0 // pred_check
    %p70 = pneg %p15
  $region19: #{text_encoder_forward.13} parent=0 // pred_check_branch
    %72 = sbr.rel (%p70) target = $region21
  $region20: #{text_encoder_forward.13} parent=0 // pred_region
    %v73 = vld [vmem:[#allocation2] sm:$0xff]
    %v74 = vld [vmem:[#allocation2 + $0x8] sm:$0xff]
    %v75 = vld [vmem:[%s2] sm:$0x1]
    %v77 = vperm.slane %v75, 0
    %v79 = vadd.f32 %v73, %v77
    %v80 = vadd.f32 %v74, %v77
    %v81 = vpack.c.bf16 %v79, %v79
    %v82 = vpack.c.bf16 %v80, %v80
    %vm83 = vcmask 781312
    %84 = vst.msk [vmem:[%s3] sm:$0xf] %vm83, %v81
    %85 = vst.msk [vmem:[%s3 + $0x4] sm:$0xf] %vm83, %v82
  $region21: #{text_encoder_forward.13} parent=0 // pred_fallthru
    _
  // Predicated region
  $region22: #{text_encoder_forward.13} parent=0 // pred_check
    _
  $region23: #{text_encoder_forward.13} parent=0 // pred_check_branch
    %87 = sbr.rel (0) target = $region25
  $region24: #{text_encoder_forward.13} parent=0 // pred_region
    _
  $region25: #{text_encoder_forward.13} parent=0 // pred_fallthru
    _
  // Predicated region
  $region26: #{text_encoder_forward.13} parent=0 // pred_check
    _
  $region27: #{text_encoder_forward.13} parent=0 // pred_check_branch
    %89 = sbr.rel (0) target = $region29
  $region28: #{text_encoder_forward.13} parent=0 // pred_region
    _
  $region29: #{text_encoder_forward.13} parent=0 // pred_fallthru
    _

// kernel: text_encoder_forward.14
$region0: #{text_encoder_forward.14}
  #allocation0 [shape = 'u32[]', space=smem, size = 0x4, offset = 0x4, fixed_abs, tag = 'smem constant byte address 0x4 - core index']
  #allocation1 [shape = 'u32[72,128]{1,0:T(1,128)}', space=vmem, size = 0x9000, scoped, tag = 'internal scratch']
  %s0 = inlined_call_operand.vmem [shape: bf16[2,8,96], index: 0, kind: input, shape index: {}]
  %s1 = inlined_call_operand.vmem [shape: f32[2,1,8], index: 1, kind: input, shape index: {}]
  %s2 = inlined_call_operand.vmem [shape: bf16[2,8,32], index: 2, kind: output, shape index: {}]
  %s3 = sld [smem:[#allocation0]]
  $region41: #{text_encoder_forward.14} parent=0
    _
  %s5 = ssub.s32 1, %s3
  %s6 = scalar_select 0, %s5, %s3
  loop: start=0, step=1, limit=4
  $region2: #{text_encoder_forward.14} parent=0 // loop_pre_header
    _
  $region3: #{text_encoder_forward.14} parent=0 // loop_header
    %s8 = sphi 0, %s12
    %p9 = scmp.ge.s32.totalorder %s8, 4
    %s18 = sphi 0, %s20
    %s21 = sphi 0, %s18
    %s22 = sphi 0, %s21
    %s38 = sphi 0, %s22
    %s44 = sphi 0, %s46
    %s47 = sphi 0, %s44
    %s48 = sphi 0, %s47
    %s64 = sphi 0, %s48
    %s70 = sphi 0, %s72
    %s73 = sphi 0, %s70
    %s74 = sphi 0, %s73
    %s90 = sphi 0, %s74
  $region4: #{text_encoder_forward.14} parent=0 // loop_header_branch
    %11 = sbr.rel (%p9) target = $region8
  $region5: #{text_encoder_forward.14} parent=0 // loop_body
    %s13 = ssub.s32 %s8, 1
    %s14 = ssub.s32 %s8, 2
    %s15 = sadd.s32 %s8, 1
    %s16 = ssub.s32 %s8, %s15
    %p17 = scmp.eq.s32.totalorder %s16, 0
    %s19 = sadd.s32 %s18, 1
    %s20 = scalar_select %p17, %s18, %s19
    %p23 = pneg %p17
    %p24 = scmp.eq.s32.totalorder %s8, 1
    %p25 = por %p23, %p24
    %p26 = scmp.ne.s32.totalorder %s18, %s21
    %p27 = scmp.eq.s32.totalorder %s8, 0
    %p28 = por %p26, %p27
    %p29 = scmp.ne.s32.totalorder %s18, %s21
    %p30 = scmp.eq.s32.totalorder %s13, 1
    %p31 = por %p29, %p30
    %p32 = scmp.ne.s32.totalorder %s21, %s22
    %p33 = scmp.eq.s32.totalorder %s13, 0
    %p34 = por %p32, %p33
    %p35 = scmp.ne.s32.totalorder %s21, %s22
    %p36 = scmp.eq.s32.totalorder %s14, 1
    %p37 = por %p35, %p36
    %p39 = scmp.ne.s32.totalorder %s22, %s38
    %p40 = scmp.eq.s32.totalorder %s14, 0
    %p41 = por %p39, %p40
    %s42 = ssub.s32 %s8, %s15
    %p43 = scmp.eq.s32.totalorder %s42, 0
    %s45 = sadd.s32 %s44, 1
    %s46 = scalar_select %p43, %s44, %s45
    %p49 = pneg %p43
    %p50 = scmp.eq.s32.totalorder %s8, 1
    %p51 = por %p49, %p50
    %p52 = scmp.ne.s32.totalorder %s44, %s47
    %p53 = scmp.eq.s32.totalorder %s8, 0
    %p54 = por %p52, %p53
    %p55 = scmp.ne.s32.totalorder %s44, %s47
    %p56 = scmp.eq.s32.totalorder %s13, 1
    %p57 = por %p55, %p56
    %p58 = scmp.ne.s32.totalorder %s47, %s48
    %p59 = scmp.eq.s32.totalorder %s13, 0
    %p60 = por %p58, %p59
    %p61 = scmp.ne.s32.totalorder %s47, %s48
    %p62 = scmp.eq.s32.totalorder %s14, 1
    %p63 = por %p61, %p62
    %p65 = scmp.ne.s32.totalorder %s48, %s64
    %p66 = scmp.eq.s32.totalorder %s14, 0
    %p67 = por %p65, %p66
    %s68 = ssub.s32 %s8, %s15
    %p69 = scmp.eq.s32.totalorder %s68, 0
    %s71 = sadd.s32 %s70, 1
    %s72 = scalar_select %p69, %s70, %s71
    %p75 = pneg %p69
    %p76 = scmp.eq.s32.totalorder %s8, 1
    %p77 = por %p75, %p76
    %p78 = scmp.ne.s32.totalorder %s70, %s73
    %p79 = scmp.eq.s32.totalorder %s8, 0
    %p80 = por %p78, %p79
    %p81 = scmp.ne.s32.totalorder %s70, %s73
    %p82 = scmp.eq.s32.totalorder %s13, 1
    %p83 = por %p81, %p82
    %p84 = scmp.ne.s32.totalorder %s73, %s74
    %p85 = scmp.eq.s32.totalorder %s13, 0
    %p86 = por %p84, %p85
    %p87 = scmp.ne.s32.totalorder %s73, %s74
    %p88 = scmp.eq.s32.totalorder %s14, 1
    %p89 = por %p87, %p88
    %p91 = scmp.ne.s32.totalorder %s74, %s90
    %p92 = scmp.eq.s32.totalorder %s14, 0
    %p93 = por %p91, %p92
    %p94 = scmp.le.s32.totalorder 1, %s8
    %p95 = scmp.lt.s32.totalorder %s8, 3
    %p96 = pnand %p94, %p95
    %p97 = pneg %p96
    // Predicated region
    $region9: #{text_encoder_forward.14} parent=5 // pred_check
      _
    $region10: #{text_encoder_forward.14} parent=5 // pred_check_branch
      %99 = sbr.rel (%p96) target = $region12
    $region11: #{text_encoder_forward.14} parent=5 // pred_region
      %s100 = ssub.s32 %s8, 1
    $region12: #{text_encoder_forward.14} parent=5 // pred_fallthru
      _
    %p101 = scmp.lt.s32.totalorder %s8, 2
    // Predicated region
    $region13: #{text_encoder_forward.14} parent=5 // pred_check
      %p102 = pneg %p101
    $region14: #{text_encoder_forward.14} parent=5 // pred_check_branch
      %104 = sbr.rel (%p102) target = $region16
    $region15: #{text_encoder_forward.14} parent=5 // pred_region
      // Predicated region
      $region17: #{text_encoder_forward.14} parent=15 // pred_check
        %p105 = pneg %p28
      $region18: #{text_encoder_forward.14} parent=15 // pred_check_branch
        %107 = sbr.rel (%p105) target = $region20
      $region19: #{text_encoder_forward.14} parent=15 // pred_region
        %p108 = scmp.lt.s32.totalorder %s8, 1
        %s109 = scalar_select %p108, %s8, 1
        %s110 = smul.addr %s109, 4
        %s111 = scalar_lea.vmem %s0, %s110
      $region20: #{text_encoder_forward.14} parent=15 // pred_fallthru
        _
      // Predicated region
      $region21: #{text_encoder_forward.14} parent=15 // pred_check
        %p112 = pneg %p54
      $region22: #{text_encoder_forward.14} parent=15 // pred_check_branch
        %114 = sbr.rel (%p112) target = $region24
      $region23: #{text_encoder_forward.14} parent=15 // pred_region
        %p115 = scmp.lt.s32.totalorder %s8, 1
        %s116 = scalar_select %p115, %s8, 1
        %s117 = scalar_lea.vmem %s1, %s116
      $region24: #{text_encoder_forward.14} parent=15 // pred_fallthru
        _
    $region16: #{text_encoder_forward.14} parent=5 // pred_fallthru
      _
    %p118 = scmp.le.s32.totalorder 1, %s8
    %p119 = scmp.lt.s32.totalorder %s8, 3
    %p120 = pnand %p118, %p119
    %p121 = pneg %p120
    // Predicated region
    $region25: #{text_encoder_forward.14} parent=5 // pred_check
      _
    $region26: #{text_encoder_forward.14} parent=5 // pred_check_branch
      %123 = sbr.rel (%p120) target = $region28
    $region27: #{text_encoder_forward.14} parent=5 // pred_region
      %s124 = ssub.s32 %s8, 1
      %p125 = scmp.lt.s32.totalorder %s13, 1
      %s126 = scalar_select %p125, %s13, 1
      %s127 = smul.addr %s126, 4
      %s128 = scalar_lea.vmem %s0, %s127
      %p129 = pneg %p34
      %p130 = pneg %p31
      %p131 = scmp.lt.s32.totalorder %s13, 1
      %s132 = scalar_select %p131, %s13, 1
      %s133 = scalar_lea.vmem %s1, %s132
      %p134 = pneg %p60
      %p135 = pneg %p57
      %p136 = pneg %p86
      %p137 = pneg %p83
      %p138 = scmp.lt.s32.totalorder %s13, 1
      %s139 = scalar_select %p138, %s13, 1
      %s140 = smul.addr %s139, 4
      %s141 = scalar_lea.vmem %s2, %s140
      %p142 = scmp.lt.s32.totalorder %s13, 1
      %s143 = scalar_select %p142, %s13, 1
      %s144 = smul.addr %s143, 4
      %s145 = scalar_lea.vmem %s0, %s144
      %p146 = scmp.lt.s32.totalorder %s13, 1
      %s147 = scalar_select %p146, %s13, 1
      %s148 = scalar_lea.vmem %s1, %s147
      %p149 = scmp.lt.s32.totalorder %s13, 1
      %s150 = scalar_select %p149, %s13, 1
      %s151 = smul.addr %s150, 4
      %s152 = scalar_lea.vmem %s2, %s151
      %v154 = vld [vmem:[%s148] sm:$0x1]
      %v155 = vld [vmem:[%s145] sm:$0xf]
      %v156 = vunpack.c.l.bf16 %v155
      %v157 = vmul.f32 %v156, 0.25
      %v158 = vpack.c.bf16 %v157, %v157
      %v160 = vperm.slane %v154, 0
      %v163 = vunpack.c.l.b16 %v155
      %v164 = vpack.c.b16 %v163, %v163
      %165 = vrot.lane.b32.xlu0 %v164, 96
      %v166 = vpop.permute.xlu0 %165
      %vm167 = vcmask 130048
      %v169 = vsel %vm167, %v158, 0
      %v172 = vsel %vm167, %v166, 0
      %174 = vmatpush.bf16.xpose.msra.mxu0 0
      %175 = vmatpush.bf16.xpose.msra.mxu0 0
      %176 = vmatpush.bf16.xpose.msra.mxu0 0
      %177 = vmatpush.bf16.xpose.msra.mxu0 0
      %178 = vmatpush.bf16.xpose.msra.mxu0 0
      %179 = vmatpush.bf16.xpose.msra.mxu0 0
      %180 = vmatpush.bf16.xpose.msra.mxu0 0
      %181 = vmatpush.bf16.xpose.msra.mxu0 %v172
      %182 = vmatmul.bf16.gmra.mxu0 %v169
      %v183 = vpop.f32.mrf.mxu0
      %v184 = vadd.f32 %v160, %v183
      %v185 = vpop.f32.mrf.mxu0
      %186 = vdwg.mxu0
      %vm187 = vcmask 64512
      %v188 = vsel %vm187, %v184, -inf
      %189 = vmax.xlane.f32.xlu0 %v188
      %v190 = vpop.xlane.xlu0 %189
      %v191 = vsub.f32 %v184, %v190
      %v192 = vmul.f32 %v191, 1.442695
      %v193 = vpow.pop %v192
      %v194 = vsel %vm187, %v193, 0.0
      %195 = vadd.xlane.f32.xlu0 %v194
      %v196 = vpop.xlane.xlu0 %195
      %v197 = vrcp.pop %v196
      %v198 = vpack.c.bf16 %v193, %v193
      %199 = vrot.lane.b32.xlu0 %v164, 64
      %v200 = vpop.permute.xlu0 %199
      %v202 = vsel %vm187, %v198, 0
      %vm204 = vcmask 1043456
      %v206 = vsel %vm204, %v200, 0
      %208 = vmatpush.bf16.msra.mxu0 0
      %209 = vmatpush.bf16.msra.mxu0 0
      %210 = vmatpush.bf16.msra.mxu0 0
      %211 = vmatpush.bf16.msra.mxu0 0
      %212 = vmatpush.bf16.msra.mxu0 0
      %213 = vmatpush.bf16.msra.mxu0 0
      %214 = vmatpush.bf16.msra.mxu0 0
      %215 = vmatpush.bf16.msra.mxu0 %v206
      %216 = vmatmul.bf16.gmra.mxu0 %v202
      %v217 = vpop.f32.mrf.mxu0
      %v218 = vadd.f32 0.0, %v217
      %v219 = vpop.f32.mrf.mxu0
      %220 = vdwg.mxu0
      %v221 = vmul.f32 %v218, %v197
      %223 = vrot.lane.b32.xlu0 %v158, 112
      %v224 = vpop.permute.xlu0 %223
      %225 = vrot.lane.b32.xlu0 %v164, 80
      %v226 = vpop.permute.xlu0 %225
      %v228 = vsel %vm167, %v224, 0
      %v231 = vsel %vm167, %v226, 0
      %233 = vmatpush.bf16.xpose.msra.mxu0 0
      %234 = vmatpush.bf16.xpose.msra.mxu0 0
      %235 = vmatpush.bf16.xpose.msra.mxu0 0
      %236 = vmatpush.bf16.xpose.msra.mxu0 0
      %237 = vmatpush.bf16.xpose.msra.mxu0 0
      %238 = vmatpush.bf16.xpose.msra.mxu0 0
      %239 = vmatpush.bf16.xpose.msra.mxu0 0
      %240 = vmatpush.bf16.xpose.msra.mxu0 %v231
      %241 = vmatmul.bf16.gmra.mxu0 %v228
      %v242 = vpop.f32.mrf.mxu0
      %v243 = vadd.f32 %v160, %v242
      %v244 = vpop.f32.mrf.mxu0
      %245 = vdwg.mxu0
      %v246 = vsel %vm187, %v243, -inf
      %247 = vmax.xlane.f32.xlu0 %v246
      %v248 = vpop.xlane.xlu0 %247
      %v249 = vsub.f32 %v243, %v248
      %v250 = vmul.f32 %v249, 1.442695
      %v251 = vpow.pop %v250
      %v252 = vsel %vm187, %v251, 0.0
      %253 = vadd.xlane.f32.xlu0 %v252
      %v254 = vpop.xlane.xlu0 %253
      %v255 = vrcp.pop %v254
      %v256 = vpack.c.bf16 %v251, %v251
      %257 = vrot.lane.b32.xlu0 %v164, 48
      %v258 = vpop.permute.xlu0 %257
      %v260 = vsel %vm187, %v256, 0
      %v263 = vsel %vm204, %v258, 0
      %265 = vmatpush.bf16.msra.mxu0 0
      %266 = vmatpush.bf16.msra.mxu0 0
      %267 = vmatpush.bf16.msra.mxu0 0
      %268 = vmatpush.bf16.msra.mxu0 0
      %269 = vmatpush.bf16.msra.mxu0 0
      %270 = vmatpush.bf16.msra.mxu0 0
      %271 = vmatpush.bf16.msra.mxu0 0
      %272 = vmatpush.bf16.msra.mxu0 %v263
      %273 = vmatmul.bf16.gmra.mxu0 %v260
      %v274 = vpop.f32.mrf.mxu0
      %v275 = vadd.f32 0.0, %v274
      %v276 = vpop.f32.mrf.mxu0
      %277 = vdwg.mxu0
      %v278 = vmul.f32 %v275, %v255
      %280 = vrot.lane.b32.xlu0 %v278, 16
      %v281 = vpop.permute.xlu0 %280
      %v283 = vsel %vm167, %v221, %v281
      %v284 = vpack.c.bf16 %v283, %v283
      %vm285 = vcmask 257024
      %286 = vst.msk [vmem:[%s152] sm:$0xf] %vm285, %v284
      %p287 = scmp.lt.s32.totalorder %s13, 1
      %s288 = scalar_select %p287, %s13, 1
      %s289 = smul.addr %s288, 4
      %s290 = scalar_lea.vmem %s2, %s289
      // Predicated region
      $region29: #{text_encoder_forward.14} parent=27 // pred_check
        %p291 = pneg %p83
      $region30: #{text_encoder_forward.14} parent=27 // pred_check_branch
        %293 = sbr.rel (%p291) target = $region32
      $region31: #{text_encoder_forward.14} parent=27 // pred_region
        _
      $region32: #{text_encoder_forward.14} parent=27 // pred_fallthru
        _
    $region28: #{text_encoder_forward.14} parent=5 // pred_fallthru
      _
    %p294 = scmp.le.s32.totalorder 2, %s8
    // Predicated region
    $region33: #{text_encoder_forward.14} parent=5 // pred_check
      %p295 = pneg %p294
    $region34: #{text_encoder_forward.14} parent=5 // pred_check_branch
      %297 = sbr.rel (%p295) target = $region36
    $region35: #{text_encoder_forward.14} parent=5 // pred_region
      %s298 = ssub.s32 %s8, 2
      // Predicated region
      $region37: #{text_encoder_forward.14} parent=35 // pred_check
        %p299 = pneg %p89
      $region38: #{text_encoder_forward.14} parent=35 // pred_check_branch
        %301 = sbr.rel (%p299) target = $region40
      $region39: #{text_encoder_forward.14} parent=35 // pred_region
        %p302 = scmp.lt.s32.totalorder %s14, 1
        %s303 = scalar_select %p302, %s14, 1
        %s304 = smul.addr %s303, 4
        %s305 = scalar_lea.vmem %s2, %s304
      $region40: #{text_encoder_forward.14} parent=35 // pred_fallthru
        _
    $region36: #{text_encoder_forward.14} parent=5 // pred_fallthru
      _
  $region6: #{text_encoder_forward.14} parent=0 // loop_footer
    %s12 = sadd.s32 1, %s8
  $region7: #{text_encoder_forward.14} parent=0 // loop_footer_branch
    %7 = sbr.rel target = $region3
  $region8: #{text_encoder_forward.14} parent=0 // loop_exit
    _

// kernel: text_encoder_forward.15
$region0: #{text_encoder_forward.15}
  #allocation0 [shape = 'u32[]', space=smem, size = 0x4, offset = 0x4, fixed_abs, tag = 'smem constant byte address 0x4 - core index']
  #allocation1 [shape = 'u32[72,128]{1,0:T(1,128)}', space=vmem, size = 0x9000, scoped, tag = 'internal scratch']
  #allocation2 [shape = 'f32[16,32]{1,0:T(8,128)}', space=vmem, size = 0x2000, scoped, tag = 'scratch operand']
  %s0 = inlined_call_operand.vmem [shape: bf16[16,32], index: 0, kind: input, shape index: {}]
  %s1 = inlined_call_operand.vmem [shape: bf16[32,32], index: 1, kind: input, shape index: {}]
  %s2 = inlined_call_operand.vmem [shape: f32[1,32], index: 2, kind: input, shape index: {}]
  %s3 = inlined_call_operand.vmem [shape: bf16[16,32], index: 3, kind: input, shape index: {}]
  %s4 = inlined_call_operand.vmem [shape: f32[1,32], index: 4, kind: input, shape index: {}]
  %s5 = inlined_call_operand.vmem [shape: f32[1,32], index: 5, kind: input, shape index: {}]
  %s6 = inlined_call_operand.vmem [shape: bf16[16,32], index: 6, kind: output, shape index: {}]
  %s7 = sld [smem:[#allocation0]]
  $region42: #{text_encoder_forward.15} parent=0
    _
  %s9 = ssub.s32 1, %s7
  %s10 = scalar_select 0, %s9, %s7
  // Predicated region
  $region2: #{text_encoder_forward.15} parent=0 // pred_check
    _
  $region3: #{text_encoder_forward.15} parent=0 // pred_check_branch
    %12 = sbr.rel (0) target = $region5
  $region4: #{text_encoder_forward.15} parent=0 // pred_region
    _
  $region5: #{text_encoder_forward.15} parent=0 // pred_fallthru
    _
  // Predicated region
  $region6: #{text_encoder_forward.15} parent=0 // pred_check
    _
  $region7: #{text_encoder_forward.15} parent=0 // pred_check_branch
    %14 = sbr.rel (0) target = $region9
  $region8: #{text_encoder_forward.15} parent=0 // pred_region
    _
  $region9: #{text_encoder_forward.15} parent=0 // pred_fallthru
    _
  // Predicated region
  $region10: #{text_encoder_forward.15} parent=0 // pred_check
    _
  $region11: #{text_encoder_forward.15} parent=0 // pred_check_branch
    %16 = sbr.rel (0) target = $region13
  $region12: #{text_encoder_forward.15} parent=0 // pred_region
    _
  $region13: #{text_encoder_forward.15} parent=0 // pred_fallthru
    _
  // Predicated region
  $region14: #{text_encoder_forward.15} parent=0 // pred_check
    _
  $region15: #{text_encoder_forward.15} parent=0 // pred_check_branch
    %18 = sbr.rel (0) target = $region17
  $region16: #{text_encoder_forward.15} parent=0 // pred_region
    _
  $region17: #{text_encoder_forward.15} parent=0 // pred_fallthru
    _
  // Predicated region
  $region18: #{text_encoder_forward.15} parent=0 // pred_check
    _
  $region19: #{text_encoder_forward.15} parent=0 // pred_check_branch
    %20 = sbr.rel (0) target = $region21
  $region20: #{text_encoder_forward.15} parent=0 // pred_region
    _
  $region21: #{text_encoder_forward.15} parent=0 // pred_fallthru
    _
  // Predicated region
  $region22: #{text_encoder_forward.15} parent=0 // pred_check
    _
  $region23: #{text_encoder_forward.15} parent=0 // pred_check_branch
    %22 = sbr.rel (0) target = $region25
  $region24: #{text_encoder_forward.15} parent=0 // pred_region
    _
  $region25: #{text_encoder_forward.15} parent=0 // pred_fallthru
    _
  %p24 = scmp.eq.s32.totalorder 0, 0
  // Predicated region
  $region26: #{text_encoder_forward.15} parent=0 // pred_check
    %p25 = pneg %p24
  $region27: #{text_encoder_forward.15} parent=0 // pred_check_branch
    %27 = sbr.rel (%p25) target = $region29
  $region28: #{text_encoder_forward.15} parent=0 // pred_region
    %vm28 = vcmask 261120
    %29 = vst.msk [vmem:[#allocation2] sm:$0xff] %vm28, 0.0
    %30 = vst.msk [vmem:[#allocation2 + $0x8] sm:$0xff] %vm28, 0.0
  $region29: #{text_encoder_forward.15} parent=0 // pred_fallthru
    _
  %v31 = vld [vmem:[#allocation2] sm:$0xff]
  %v32 = vld [vmem:[#allocation2 + $0x8] sm:$0xff]
  %v33 = vld [vmem:[%s0] sm:$0xf]
  %v34 = vld [vmem:[%s0 + $0x4] sm:$0xf]
  %v35 = vld [vmem:[%s1] sm:$0xf]
  %v36 = vld [vmem:[%s1 + $0x4] sm:$0xf]
  %v37 = vld [vmem:[%s1 + $0x8] sm:$0xf]
  %v38 = vld [vmem:[%s1 + $0xc] sm:$0xf]
  %v41 = vunpack.c.l.b16 %v33
  %v42 = vunpack.c.l.b16 %v34
  %v43 = vpack.c.b16 %v42, %v41
  %v48 = vunpack.c.l.b16 %v35
  %v49 = vunpack.c.l.b16 %v36
  %v50 = vunpack.c.l.b16 %v37
  %v51 = vunpack.c.l.b16 %v38
  %v52 = vpack.c.b16 %v49, %v48
  %v53 = vpack.c.b16 %v51, %v50
  %vm56 = vcmask 261120
  %v58 = vsel %vm56, %v43, 0
  %60 = vmatpush.bf16.msra.mxu0 0
  %61 = vmatpush.bf16.msra.mxu0 0
  %62 = vmatpush.bf16.msra.mxu0 0
  %63 = vmatpush.bf16.msra.mxu0 0
  %64 = vmatpush.bf16.msra.mxu0 0
  %65 = vmatpush.bf16.msra.mxu0 0
  %66 = vmatpush.bf16.msra.mxu0 %v53
  %67 = vmatpush.bf16.msra.mxu0 %v52
  %68 = vmatmul.bf16.gmra.mxu0 %v58
  %v69 = vpop.f32.mrf.mxu0
  %v70 = vadd.f32 0.0, %v69
  %v71 = vpop.f32.mrf.mxu0
  %v72 = vadd.f32 0.0, %v71
  %73 = vdwg.mxu0
  %v74 = vadd.f32 %v31, %v70
  %v75 = vadd.f32 %v32, %v72
  %76 = vst.msk [vmem:[#allocation2] sm:$0xff] %vm56, %v74
  %77 = vst.msk [vmem:[#allocation2 + $0x8] sm:$0xff] %vm56, %v75
  // Predicated region
  $region30: #{text_encoder_forward.15} parent=0 // pred_check
    %p78 = pneg %p24
  $region31: #{text_encoder_forward.15} parent=0 // pred_check_branch
    %80 = sbr.rel (%p78) target = $region33
  $region32: #{text_encoder_forward.15} parent=0 // pred_region
    %v81 = vld [vmem:[#allocation2] sm:$0xff]
    %v82 = vld [vmem:[#allocation2 + $0x8] sm:$0xff]
    %v83 = vld [vmem:[%s2] sm:$0x1]
    %v85 = vperm.slane %v83, 0
    %v87 = vadd.f32 %v81, %v85
    %v88 = vadd.f32 %v82, %v85
    %v89 = vld [vmem:[%s3] sm:$0xf]
    %v90 = vld [vmem:[%s3 + $0x4] sm:$0xf]
    %v91 = vunpack.c.l.bf16 %v89
    %v92 = vunpack.c.l.bf16 %v90
    %v93 = vadd.f32 %v87, %v91
    %v94 = vadd.f32 %v88, %v92
    %v95 = vsel %vm56, %v93, 0.0
    %96 = vadd.xlane.f32.xlu0 %v95
    %v97 = vpop.xlane.xlu0 %96
    %v98 = vsel %vm56, %v94, 0.0
    %99 = vadd.xlane.f32.xlu0 %v98
    %v100 = vpop.xlane.xlu0 %99
    %v101 = vrcp.pop 32.0
    %v102 = vmul.f32 32.0, %v101
    %v103 = vsub.f32 1.0, %v102
    %v104 = vmul.f32 %v101, %v103
    %v105 = vadd.f32 %v101, %v104
    %vm106 = vweird.f32 %v101
    %v107 = vsel %vm106, %v101, %v105
    %v108 = vmul.f32 %v97, %v107
    %v109 = vmul.f32 %v100, %v107
    %v110 = vsub.f32 %v93, %v108
    %v111 = vsub.f32 %v94, %v109
    %v112 = vmul.f32 %v110, %v110
    %v113 = vmul.f32 %v111, %v111
    %v114 = vsel %vm56, %v112, 0.0
    %115 = vadd.xlane.f32.xlu0 %v114
    %v116 = vpop.xlane.xlu0 %115
    %v117 = vsel %vm56, %v113, 0.0
    %118 = vadd.xlane.f32.xlu0 %v117
    %v119 = vpop.xlane.xlu0 %118
    %v120 = vmul.f32 %v116, %v107
    %v121 = vmul.f32 %v119, %v107
    %v122 = vadd.f32 %v120, 1e-12
    %v123 = vadd.f32 %v121, 1e-12
    %v124 = vrsqrt.pop %v122
    %v125 = vmul.f32 %v124, %v122
    %v126 = vmul.f32 %v125, %v124
    %v127 = vmul.f32 0.5, %v126
    %v128 = vsub.f32 1.5, %v127
    %v129 = vmul.f32 %v124, %v128
    %vm130 = vweird.f32 %v122
    %vm131 = vweird.f32 %v124
    %vm132 = vmor %vm130, %vm131
    %v133 = vsel %vm132, %v124, %v129
    %v134 = vrsqrt.pop %v123
    %v135 = vmul.f32 %v134, %v123
    %v136 = vmul.f32 %v135, %v134
    %v137 = vmul.f32 0.5, %v136
    %v138 = vsub.f32 1.5, %v137
    %v139 = vmul.f32 %v134, %v138
    %vm140 = vweird.f32 %v123
    %vm141 = vweird.f32 %v134
    %vm142 = vmor %vm140, %vm141
    %v143 = vsel %vm142, %v134, %v139
    %v144 = vmul.f32 %v110, %v133
    %v145 = vmul.f32 %v111, %v143
    %v146 = vld [vmem:[%s4] sm:$0x1]
    %v148 = vperm.slane %v146, 0
    %v150 = vmul.f32 %v144, %v148
    %v151 = vmul.f32 %v145, %v148
    %v152 = vld [vmem:[%s5] sm:$0x1]
    %v154 = vperm.slane %v152, 0
    %v156 = vadd.f32 %v150, %v154
    %v157 = vadd.f32 %v151, %v154
    %v158 = vpack.c.bf16 %v156, %v156
    %v159 = vpack.c.bf16 %v157, %v157
    %vm160 = vcmask 257024
    %161 = vst.msk [vmem:[%s6] sm:$0xf] %vm160, %v158
    %162 = vst.msk [vmem:[%s6 + $0x4] sm:$0xf] %vm160, %v159
  $region33: #{text_encoder_forward.15} parent=0 // pred_fallthru
    _
  // Predicated region
  $region34: #{text_encoder_forward.15} parent=0 // pred_check
    _
  $region35: #{text_encoder_forward.15} parent=0 // pred_check_branch
    %164 = sbr.rel (0) target = $region37
  $region36: #{text_encoder_forward.15} parent=0 // pred_region
    _
  $region37: #{text_encoder_forward.15} parent=0 // pred_fallthru
    _
  // Predicated region
  $region38: #{text_encoder_forward.15} parent=0 // pred_check
    _
  $region39: #{text_encoder_forward.15} parent=0 // pred_check_branch
    %166 = sbr.rel (0) target = $region41
  $region40: #{text_encoder_forward.15} parent=0 // pred_region
    _
  $region41: #{text_encoder_forward.15} parent=0 // pred_fallthru
    _

// kernel: text_encoder_forward.16
$region0: #{text_encoder_forward.16}
  #allocation0 [shape = 'u32[]', space=smem, size = 0x4, offset = 0x4, fixed_abs, tag = 'smem constant byte address 0x4 - core index']
  #allocation1 [shape = 'u32[72,128]{1,0:T(1,128)}', space=vmem, size = 0x9000, scoped, tag = 'internal scratch']
  #allocation2 [shape = 'f32[16,64]{1,0:T(8,128)}', space=vmem, size = 0x2000, scoped, tag = 'scratch operand']
  %s0 = inlined_call_operand.vmem [shape: bf16[16,32], index: 0, kind: input, shape index: {}]
  %s1 = inlined_call_operand.vmem [shape: bf16[32,64], index: 1, kind: input, shape index: {}]
  %s2 = inlined_call_operand.vmem [shape: f32[1,64], index: 2, kind: input, shape index: {}]
  %s3 = inlined_call_operand.vmem [shape: bf16[16,64], index: 3, kind: output, shape index: {}]
  %s4 = sld [smem:[#allocation0]]
  $region30: #{text_encoder_forward.16} parent=0
    _
  %s6 = ssub.s32 1, %s4
  %s7 = scalar_select 0, %s6, %s4
  // Predicated region
  $region2: #{text_encoder_forward.16} parent=0 // pred_check
    _
  $region3: #{text_encoder_forward.16} parent=0 // pred_check_branch
    %9 = sbr.rel (0) target = $region5
  $region4: #{text_encoder_forward.16} parent=0 // pred_region
    _
  $region5: #{text_encoder_forward.16} parent=0 // pred_fallthru
    _
  // Predicated region
  $region6: #{text_encoder_forward.16} parent=0 // pred_check
    _
  $region7: #{text_encoder_forward.16} parent=0 // pred_check_branch
    %11 = sbr.rel (0) target = $region9
  $region8: #{text_encoder_forward.16} parent=0 // pred_region
    _
  $region9: #{text_encoder_forward.16} parent=0 // pred_fallthru
    _
  // Predicated region
  $region10: #{text_encoder_forward.16} parent=0 // pred_check
    _
  $region11: #{text_encoder_forward.16} parent=0 // pred_check_branch
    %13 = sbr.rel (0) target = $region13
  $region12: #{text_encoder_forward.16} parent=0 // pred_region
    _
  $region13: #{text_encoder_forward.16} parent=0 // pred_fallthru
    _
  %p15 = scmp.eq.s32.totalorder 0, 0
  // Predicated region
  $region14: #{text_encoder_forward.16} parent=0 // pred_check
    %p16 = pneg %p15
  $region15: #{text_encoder_forward.16} parent=0 // pred_check_branch
    %18 = sbr.rel (%p16) target = $region17
  $region16: #{text_encoder_forward.16} parent=0 // pred_region
    %vm19 = vcmask 523264
    %20 = vst.msk [vmem:[#allocation2] sm:$0xff] %vm19, 0.0
    %21 = vst.msk [vmem:[#allocation2 + $0x8] sm:$0xff] %vm19, 0.0
  $region17: #{text_encoder_forward.16} parent=0 // pred_fallthru
    _
  %v22 = vld [vmem:[#allocation2] sm:$0xff]
  %v23 = vld [vmem:[#allocation2 + $0x8] sm:$0xff]
  %v24 = vld [vmem:[%s0] sm:$0xf]
  %v25 = vld [vmem:[%s0 + $0x4] sm:$0xf]
  %v26 = vld [vmem:[%s1] sm:$0xf]
  %v27 = vld [vmem:[%s1 + $0x4] sm:$0xf]
  %v28 = vld [vmem:[%s1 + $0x8] sm:$0xf]
  %v29 = vld [vmem:[%s1 + $0xc] sm:$0xf]
  %v32 = vunpack.c.l.b16 %v24
  %v33 = vunpack.c.l.b16 %v25
  %v34 = vpack.c.b16 %v33, %v32
  %v39 = vunpack.c.l.b16 %v26
  %v40 = vunpack.c.l.b16 %v27
  %v41 = vunpack.c.l.b16 %v28
  %v42 = vunpack.c.l.b16 %v29
  %v43 = vpack.c.b16 %v40, %v39
  %v44 = vpack.c.b16 %v42, %v41
  %vm47 = vcmask 261120
  %v49 = vsel %vm47, %v34, 0
  %51 = vmatpush.bf16.msra.mxu0 0
  %52 = vmatpush.bf16.msra.mxu0 0
  %53 = vmatpush.bf16.msra.mxu0 0
  %54 = vmatpush.bf16.msra.mxu0 0
  %55 = vmatpush.bf16.msra.mxu0 0
  %56 = vmatpush.bf16.msra.mxu0 0
  %57 = vmatpush.bf16.msra.mxu0 %v44
  %58 = vmatpush.bf16.msra.mxu0 %v43
  %59 = vmatmul.bf16.gmra.mxu0 %v49
  %v60 = vpop.f32.mrf.mxu0
  %v61 = vadd.f32 0.0, %v60
  %v62 = vpop.f32.mrf.mxu0
  %v63 = vadd.f32 0.0, %v62
  %64 = vdwg.mxu0
  %v65 = vadd.f32 %v22, %v61
  %v66 = vadd.f32 %v23, %v63
  %vm67 = vcmask 523264
  %68 = vst.msk [vmem:[#allocation2] sm:$0xff] %vm67, %v65
  %69 = vst.msk [vmem:[#allocation2 + $0x8] sm:$0xff] %vm67, %v66
  // Predicated region
  $region18: #{text_encoder_forward.16} parent=0 // pred_check
    %p70 = pneg %p15
  $region19: #{text_encoder_forward.16} parent=0 // pred_check_branch
    %72 = sbr.rel (%p70) target = $region21
  $region20: #{text_encoder_forward.16} parent=0 // pred_region
    %v73 = vld [vmem:[#allocation2] sm:$0xff]
    %v74 = vld [vmem:[#allocation2 + $0x8] sm:$0xff]
    %v75 = vld [vmem:[%s2] sm:$0x1]
    %v77 = vperm.slane %v75, 0
    %v79 = vadd.f32 %v73, %v77
    %v80 = vadd.f32 %v74, %v77
    %v81 = vmul.f32 %v79, %v79
    %v82 = vmul.f32 %v80, %v80
    %v83 = vmul.f32 %v79, %v81
    %v84 = vmul.f32 %v80, %v82
    %v85 = vmul.f32 %v83, 0.044715
    %v86 = vmul.f32 %v84, 0.044715
    %v87 = vadd.f32 %v79, %v85
    %v88 = vadd.f32 %v80, %v86
    %v89 = vmul.f32 %v87, 0.7978846
    %v90 = vmul.f32 %v88, 0.7978846
    %v91 = vtanh.pop %v89
    %v92 = vtanh.pop %v90
    %v93 = vadd.f32 %v91, 1.0
    %v94 = vadd.f32 %v92, 1.0
    %v95 = vmul.f32 %v93, 0.5
    %v96 = vmul.f32 %v94, 0.5
    %v97 = vmul.f32 %v79, %v95
    %v98 = vmul.f32 %v80, %v96
    %v99 = vpack.c.bf16 %v97, %v97
    %v100 = vpack.c.bf16 %v98, %v98
    %vm101 = vcmask 519168
    %102 = vst.msk [vmem:[%s3] sm:$0xf] %vm101, %v99
    %103 = vst.msk [vmem:[%s3 + $0x4] sm:$0xf] %vm101, %v100
  $region21: #{text_encoder_forward.16} parent=0 // pred_fallthru
    _
  // Predicated region
  $region22: #{text_encoder_forward.16} parent=0 // pred_check
    _
  $region23: #{text_encoder_forward.16} parent=0 // pred_check_branch
    %105 = sbr.rel (0) target = $region25
  $region24: #{text_encoder_forward.16} parent=0 // pred_region
    _
  $region25: #{text_encoder_forward.16} parent=0 // pred_fallthru
    _
  // Predicated region
  $region26: #{text_encoder_forward.16} parent=0 // pred_check
    _
  $region27: #{text_encoder_forward.16} parent=0 // pred_check_branch
    %107 = sbr.rel (0) target = $region29
  $region28: #{text_encoder_forward.16} parent=0 // pred_region
    _
  $region29: #{text_encoder_forward.16} parent=0 // pred_fallthru
    _

// kernel: text_encoder_forward.23
$region0: #{text_encoder_forward.23}
  #allocation0 [shape = 'u32[]', space=smem, size = 0x4, offset = 0x4, fixed_abs, tag = 'smem constant byte address 0x4 - core index']
  #allocation1 [shape = 'u32[72,128]{1,0:T(1,128)}', space=vmem, size = 0x9000, scoped, tag = 'internal scratch']
  %s0 = inlined_call_operand.vmem [shape: bf16[16,32], index: 0, kind: input, shape index: {}]
  %s1 = inlined_call_operand.vmem [shape: bf16[16,32], index: 1, kind: input, shape index: {}]
  %s2 = inlined_call_operand.vmem [shape: bf16[16,32], index: 2, kind: input, shape index: {}]
  %s3 = inlined_call_operand.hbm [shape: f32[16,32], index: 3, kind: output, shape index: {}]
  %s4 = sld [smem:[#allocation0]]
  $region22: #{text_encoder_forward.23} parent=0
    _
  %s6 = ssub.s32 1, %s4
  %s7 = scalar_select 0, %s6, %s4
  $region1: #{text_encoder_forward.23} parent=0
    #allocation2 [shape = 'u8[8192]{0}', space=vmem, size = 0x2000, scoped, tag = 'output window, operand 0, single buffered']
    #allocation3 [shape = 's32[1]{0}', space=sflag, size = 0x4, scoped, tag = 'scoped memory for text_encoder_forward.23']
    %8 = vsyncpa [#allocation3], 0
    // Predicated region
    $region2: #{text_encoder_forward.23} parent=1 // pred_check
      _
    $region3: #{text_encoder_forward.23} parent=1 // pred_check_branch
      %10 = sbr.rel (0) target = $region5
    $region4: #{text_encoder_forward.23} parent=1 // pred_region
      _
    $region5: #{text_encoder_forward.23} parent=1 // pred_fallthru
      _
    // Predicated region
    $region6: #{text_encoder_forward.23} parent=1 // pred_check
      _
    $region7: #{text_encoder_forward.23} parent=1 // pred_check_branch
      %12 = sbr.rel (0) target = $region9
    $region8: #{text_encoder_forward.23} parent=1 // pred_region
      _
    $region9: #{text_encoder_forward.23} parent=1 // pred_fallthru
      _
    // Predicated region
    $region10: #{text_encoder_forward.23} parent=1 // pred_check
      _
    $region11: #{text_encoder_forward.23} parent=1 // pred_check_branch
      %14 = sbr.rel (0) target = $region13
    $region12: #{text_encoder_forward.23} parent=1 // pred_region
      _
    $region13: #{text_encoder_forward.23} parent=1 // pred_fallthru
      _
    %v15 = vld [vmem:[%s0] sm:$0xf]
    %v16 = vld [vmem:[%s0 + $0x4] sm:$0xf]
    %v17 = vunpack.c.l.bf16 %v15
    %v18 = vunpack.c.l.bf16 %v16
    %v19 = vld [vmem:[%s1] sm:$0xf]
    %v20 = vld [vmem:[%s1 + $0x4] sm:$0xf]
    %v21 = vunpack.c.l.bf16 %v19
    %v22 = vunpack.c.l.bf16 %v20
    %v23 = vadd.f32 %v17, %v21
    %v24 = vadd.f32 %v18, %v22
    %v25 = vld [vmem:[%s2] sm:$0xf]
    %v26 = vld [vmem:[%s2 + $0x4] sm:$0xf]
    %v27 = vunpack.c.l.bf16 %v25
    %v28 = vunpack.c.l.bf16 %v26
    %v29 = vadd.f32 %v23, %v27
    %v30 = vadd.f32 %v24, %v28
    %v31 = vmul.f32 %v29, 0.33333334
    %v32 = vmul.f32 %v30, 0.33333334
    %vm33 = vcmask 261120
    %34 = vst.msk [vmem:[#allocation2] sm:$0xff] %vm33, %v31
    %35 = vst.msk [vmem:[#allocation2 + $0x8] sm:$0xff] %vm33, %v32
    // Predicated region
    $region14: #{text_encoder_forward.23} parent=1 // pred_check
      _
    $region15: #{text_encoder_forward.23} parent=1 // pred_check_branch
      %37 = sbr.rel (0) target = $region17
    $region16: #{text_encoder_forward.23} parent=1 // pred_region
      %39 = vsyncadd [#allocation3], 0
      %s40 = sshll.u32 [#allocation2], 4
      %s41 = int_to_ptr.vmem [resolvable:$true] %s40
      %s42 = sshll.u32 %s3, 4
      %s43 = int_to_ptr.hbm [resolvable:$true] %s42
      %48 = dma.vmem_to_hbm [thread:$0]  %s41, 256, %s43, [#allocation3], 128, 128, 8
    $region17: #{text_encoder_forward.23} parent=1 // pred_fallthru
      _
    // Predicated region
    $region18: #{text_encoder_forward.23} parent=1 // pred_check
      _
    $region19: #{text_encoder_forward.23} parent=1 // pred_check_branch
      %50 = sbr.rel (0) target = $region21
    $region20: #{text_encoder_forward.23} parent=1 // pred_region
      %52 = dma.done [#allocation3], 256
    $region21: #{text_encoder_forward.23} parent=1 // pred_fallthru
      _
    %53 = vsyncpa [#allocation3], 1

// kernel: text_encoder_forward.17
$region0: #{text_encoder_forward.17}
  #allocation0 [shape = 'u32[]', space=smem, size = 0x4, offset = 0x4, fixed_abs, tag = 'smem constant byte address 0x4 - core index']
  #allocation1 [shape = 'u32[72,128]{1,0:T(1,128)}', space=vmem, size = 0x9000, scoped, tag = 'internal scratch']
  #allocation2 [shape = 'f32[16,32]{1,0:T(8,128)}', space=vmem, size = 0x2000, scoped, tag = 'scratch operand']
  %s0 = inlined_call_operand.vmem [shape: bf16[16,64], index: 0, kind: input, shape index: {}]
  %s1 = inlined_call_operand.vmem [shape: bf16[64,32], index: 1, kind: input, shape index: {}]
  %s2 = inlined_call_operand.vmem [shape: f32[1,32], index: 2, kind: input, shape index: {}]
  %s3 = inlined_call_operand.vmem [shape: bf16[16,32], index: 3, kind: input, shape index: {}]
  %s4 = inlined_call_operand.vmem [shape: f32[1,32], index: 4, kind: input, shape index: {}]
  %s5 = inlined_call_operand.vmem [shape: f32[1,32], index: 5, kind: input, shape index: {}]
  %s6 = inlined_call_operand.vmem [shape: bf16[16,32], index: 6, kind: output, shape index: {}]
  %s7 = sld [smem:[#allocation0]]
  $region42: #{text_encoder_forward.17} parent=0
    _
  %s9 = ssub.s32 1, %s7
  %s10 = scalar_select 0, %s9, %s7
  // Predicated region
  $region2: #{text_encoder_forward.17} parent=0 // pred_check
    _
  $region3: #{text_encoder_forward.17} parent=0 // pred_check_branch
    %12 = sbr.rel (0) target = $region5
  $region4: #{text_encoder_forward.17} parent=0 // pred_region
    _
  $region5: #{text_encoder_forward.17} parent=0 // pred_fallthru
    _
  // Predicated region
  $region6: #{text_encoder_forward.17} parent=0 // pred_check
    _
  $region7: #{text_encoder_forward.17} parent=0 // pred_check_branch
    %14 = sbr.rel (0) target = $region9
  $region8: #{text_encoder_forward.17} parent=0 // pred_region
    _
  $region9: #{text_encoder_forward.17} parent=0 // pred_fallthru
    _
  // Predicated region
  $region10: #{text_encoder_forward.17} parent=0 // pred_check
    _
  $region11: #{text_encoder_forward.17} parent=0 // pred_check_branch
    %16 = sbr.rel (0) target = $region13
  $region12: #{text_encoder_forward.17} parent=0 // pred_region
    _
  $region13: #{text_encoder_forward.17} parent=0 // pred_fallthru
    _
  // Predicated region
  $region14: #{text_encoder_forward.17} parent=0 // pred_check
    _
  $region15: #{text_encoder_forward.17} parent=0 // pred_check_branch
    %18 = sbr.rel (0) target = $region17
  $region16: #{text_encoder_forward.17} parent=0 // pred_region
    _
  $region17: #{text_encoder_forward.17} parent=0 // pred_fallthru
    _
  // Predicated region
  $region18: #{text_encoder_forward.17} parent=0 // pred_check
    _
  $region19: #{text_encoder_forward.17} parent=0 // pred_check_branch
    %20 = sbr.rel (0) target = $region21
  $region20: #{text_encoder_forward.17} parent=0 // pred_region
    _
  $region21: #{text_encoder_forward.17} parent=0 // pred_fallthru
    _
  // Predicated region
  $region22: #{text_encoder_forward.17} parent=0 // pred_check
    _
  $region23: #{text_encoder_forward.17} parent=0 // pred_check_branch
    %22 = sbr.rel (0) target = $region25
  $region24: #{text_encoder_forward.17} parent=0 // pred_region
    _
  $region25: #{text_encoder_forward.17} parent=0 // pred_fallthru
    _
  %p24 = scmp.eq.s32.totalorder 0, 0
  // Predicated region
  $region26: #{text_encoder_forward.17} parent=0 // pred_check
    %p25 = pneg %p24
  $region27: #{text_encoder_forward.17} parent=0 // pred_check_branch
    %27 = sbr.rel (%p25) target = $region29
  $region28: #{text_encoder_forward.17} parent=0 // pred_region
    %vm28 = vcmask 261120
    %29 = vst.msk [vmem:[#allocation2] sm:$0xff] %vm28, 0.0
    %30 = vst.msk [vmem:[#allocation2 + $0x8] sm:$0xff] %vm28, 0.0
  $region29: #{text_encoder_forward.17} parent=0 // pred_fallthru
    _
  %v31 = vld [vmem:[#allocation2] sm:$0xff]
  %v32 = vld [vmem:[#allocation2 + $0x8] sm:$0xff]
  %v33 = vld [vmem:[%s0] sm:$0xf]
  %v34 = vld [vmem:[%s0 + $0x4] sm:$0xf]
  %v35 = vld [vmem:[%s1] sm:$0xf]
  %v36 = vld [vmem:[%s1 + $0x4] sm:$0xf]
  %v37 = vld [vmem:[%s1 + $0x8] sm:$0xf]
  %v38 = vld [vmem:[%s1 + $0xc] sm:$0xf]
  %v39 = vld [vmem:[%s1 + $0x10] sm:$0xf]
  %v40 = vld [vmem:[%s1 + $0x14] sm:$0xf]
  %v41 = vld [vmem:[%s1 + $0x18] sm:$0xf]
  %v42 = vld [vmem:[%s1 + $0x1c] sm:$0xf]
  %v45 = vunpack.c.l.b16 %v33
  %v46 = vunpack.c.l.b16 %v34
  %v47 = vpack.c.b16 %v46, %v45
  %v56 = vunpack.c.l.b16 %v35
  %v57 = vunpack.c.l.b16 %v36
  %v58 = vunpack.c.l.b16 %v37
  %v59 = vunpack.c.l.b16 %v38
  %v60 = vunpack.c.l.b16 %v39
  %v61 = vunpack.c.l.b16 %v40
  %v62 = vunpack.c.l.b16 %v41
  %v63 = vunpack.c.l.b16 %v42
  %v64 = vpack.c.b16 %v57, %v56
  %v65 = vpack.c.b16 %v59, %v58
  %v66 = vpack.c.b16 %v61, %v60
  %v67 = vpack.c.b16 %v63, %v62
  %vm72 = vcmask 523264
  %v74 = vsel %vm72, %v47, 0
  %76 = vmatpush.bf16.msra.mxu0 0
  %77 = vmatpush.bf16.msra.mxu0 0
  %78 = vmatpush.bf16.msra.mxu0 0
  %79 = vmatpush.bf16.msra.mxu0 0
  %80 = vmatpush.bf16.msra.mxu0 %v67
  %81 = vmatpush.bf16.msra.mxu0 %v66
  %82 = vmatpush.bf16.msra.mxu0 %v65
  %83 = vmatpush.bf16.msra.mxu0 %v64
  %84 = vmatmul.bf16.gmra.mxu0 %v74
  %v85 = vpop.f32.mrf.mxu0
  %v86 = vadd.f32 0.0, %v85
  %v87 = vpop.f32.mrf.mxu0
  %v88 = vadd.f32 0.0, %v87
  %89 = vdwg.mxu0
  %v90 = vadd.f32 %v31, %v86
  %v91 = vadd.f32 %v32, %v88
  %vm92 = vcmask 261120
  %93 = vst.msk [vmem:[#allocation2] sm:$0xff] %vm92, %v90
  %94 = vst.msk [vmem:[#allocation2 + $0x8] sm:$0xff] %vm92, %v91
  // Predicated region
  $region30: #{text_encoder_forward.17} parent=0 // pred_check
    %p95 = pneg %p24
  $region31: #{text_encoder_forward.17} parent=0 // pred_check_branch
    %97 = sbr.rel (%p95) target = $region33
  $region32: #{text_encoder_forward.17} parent=0 // pred_region
    %v98 = vld [vmem:[#allocation2] sm:$0xff]
    %v99 = vld [vmem:[#allocation2 + $0x8] sm:$0xff]
    %v100 = vld [vmem:[%s2] sm:$0x1]
    %v102 = vperm.slane %v100, 0
    %v104 = vadd.f32 %v98, %v102
    %v105 = vadd.f32 %v99, %v102
    %v106 = vld [vmem:[%s3] sm:$0xf]
    %v107 = vld [vmem:[%s3 + $0x4] sm:$0xf]
    %v108 = vunpack.c.l.bf16 %v106
    %v109 = vunpack.c.l.bf16 %v107
    %v110 = vadd.f32 %v104, %v108
    %v111 = vadd.f32 %v105, %v109
    %v112 = vsel %vm92, %v110, 0.0
    %113 = vadd.xlane.f32.xlu0 %v112
    %v114 = vpop.xlane.xlu0 %113
    %v115 = vsel %vm92, %v111, 0.0
    %116 = vadd.xlane.f32.xlu0 %v115
    %v117 = vpop.xlane.xlu0 %116
    %v118 = vrcp.pop 32.0
    %v119 = vmul.f32 32.0, %v118
    %v120 = vsub.f32 1.0, %v119
    %v121 = vmul.f32 %v118, %v120
    %v122 = vadd.f32 %v118, %v121
    %vm123 = vweird.f32 %v118
    %v124 = vsel %vm123, %v118, %v122
    %v125 = vmul.f32 %v114, %v124
    %v126 = vmul.f32 %v117, %v124
    %v127 = vsub.f32 %v110, %v125
    %v128 = vsub.f32 %v111, %v126
    %v129 = vmul.f32 %v127, %v127
    %v130 = vmul.f32 %v128, %v128
    %v131 = vsel %vm92, %v129, 0.0
    %132 = vadd.xlane.f32.xlu0 %v131
    %v133 = vpop.xlane.xlu0 %132
    %v134 = vsel %vm92, %v130, 0.0
    %135 = vadd.xlane.f32.xlu0 %v134
    %v136 = vpop.xlane.xlu0 %135
    %v137 = vmul.f32 %v133, %v124
    %v138 = vmul.f32 %v136, %v124
    %v139 = vadd.f32 %v137, 1e-12
    %v140 = vadd.f32 %v138, 1e-12
    %v141 = vrsqrt.pop %v139
    %v142 = vmul.f32 %v141, %v139
    %v143 = vmul.f32 %v142, %v141
    %v144 = vmul.f32 0.5, %v143
    %v145 = vsub.f32 1.5, %v144
    %v146 = vmul.f32 %v141, %v145
    %vm147 = vweird.f32 %v139
    %vm148 = vweird.f32 %v141
    %vm149 = vmor %vm147, %vm148
    %v150 = vsel %vm149, %v141, %v146
    %v151 = vrsqrt.pop %v140
    %v152 = vmul.f32 %v151, %v140
    %v153 = vmul.f32 %v152, %v151
    %v154 = vmul.f32 0.5, %v153
    %v155 = vsub.f32 1.5, %v154
    %v156 = vmul.f32 %v151, %v155
    %vm157 = vweird.f32 %v140
    %vm158 = vweird.f32 %v151
    %vm159 = vmor %vm157, %vm158
    %v160 = vsel %vm159, %v151, %v156
    %v161 = vmul.f32 %v127, %v150
    %v162 = vmul.f32 %v128, %v160
    %v163 = vld [vmem:[%s4] sm:$0x1]
    %v165 = vperm.slane %v163, 0
    %v167 = vmul.f32 %v161, %v165
    %v168 = vmul.f32 %v162, %v165
    %v169 = vld [vmem:[%s5] sm:$0x1]
    %v171 = vperm.slane %v169, 0
    %v173 = vadd.f32 %v167, %v171
    %v174 = vadd.f32 %v168, %v171
    %v175 = vpack.c.bf16 %v173, %v173
    %v176 = vpack.c.bf16 %v174, %v174
    %vm177 = vcmask 257024
    %178 = vst.msk [vmem:[%s6] sm:$0xf] %vm177, %v175
    %179 = vst.msk [vmem:[%s6 + $0x4] sm:$0xf] %vm177, %v176
  $region33: #{text_encoder_forward.17} parent=0 // pred_fallthru
    _
  // Predicated region
  $region34: #{text_encoder_forward.17} parent=0 // pred_check
    _
  $region35: #{text_encoder_forward.17} parent=0 // pred_check_branch
    %181 = sbr.rel (0) target = $region37
  $region36: #{text_encoder_forward.17} parent=0 // pred_region
    _
  $region37: #{text_encoder_forward.17} parent=0 // pred_fallthru
    _
  // Predicated region
  $region38: #{text_encoder_forward.17} parent=0 // pred_check
    _
  $region39: #{text_encoder_forward.17} parent=0 // pred_check_branch
    %183 = sbr.rel (0) target = $region41
  $region40: #{text_encoder_forward.17} parent=0 // pred_region
    _
  $region41: #{text_encoder_forward.17} parent=0 // pred_fallthru
    _

</llo_original>
